<compile_context>
chip_gen: v5e
topology: v5e:2x2
jax: 0.10.0
libtpu: 0.0.40
codegen_flags: <defaults>
</compile_context>

<pallas_src>
import functools
import math

import jax
import jax.numpy as jnp
from jax.experimental import pallas as pl
from jax.experimental.pallas import tpu as pltpu


# ----------------------------------------------------------------------------
# Small in-kernel helpers (f32 math)
# ----------------------------------------------------------------------------

def _layer_norm_f32(x, scale, shift, eps=1e-5):
    """LayerNorm over the last dim (biased variance), matches the PyTorch module."""
    mean = jnp.mean(x, axis=-1, keepdims=True)
    var = jnp.mean((x - mean) ** 2, axis=-1, keepdims=True)
    return (x - mean) * jax.lax.rsqrt(var + eps) * scale + shift


def _gelu_tanh_f32(x):
    """tanh-approx GELU, matches the PyTorch GELU module."""
    c = jnp.float32(math.sqrt(2.0 / math.pi))
    return 0.5 * x * (1.0 + jnp.tanh(c * (x + 0.044715 * (x ** 3))))


def _round_up(x, m):
    return ((x + m - 1) // m) * m


def _clamp_vmem_limit(nbytes, lo=16 << 20, hi=64 << 20):
    """Explicit scoped-VMEM budget: always above v5e's 16 MiB default, capped at
    v7x's 64 MiB physical."""
    return int(min(max(int(nbytes), lo), hi))


def _block_vmem_estimate_bytes(T, D, H):
    bf, f4 = 2, 4
    weights = 12 * D * D * bf          # wqkv + wo + w1 + w2 (bf16, single-buffered)
    small = 16 * D * f4                # LN params + biases (f32)
    xio = 2 * 2 * T * D * bf           # x / o blocks, double-buffered bf16
    interm = 14 * T * D * f4           # qkv, h1, gelu, residuals (f32)
    scores = 4 * T * T * f4            # a few live [T,T] score tiles (unrolled heads)
    scratch = T * D * bf               # ctx scratch
    return weights + small + xio + interm + scores + scratch


# ----------------------------------------------------------------------------
# Fused transformer-block kernel (one pallas_call per block, grid over batch)
# ----------------------------------------------------------------------------

def transformer_block_kernel(*refs, num_heads, scale, qkv_bias):
    f32, bf16 = jnp.float32, jnp.bfloat16
    it = iter(refs)
    x_ref = next(it)                               # [1, T, D] bf16 residual stream
    ln1_s_ref, ln1_b_ref = next(it), next(it)      # [1, D] f32
    wqkv_ref = next(it)                            # [D, 3D] bf16
    bqkv_ref = next(it) if qkv_bias else None      # [1, 3D] f32 (only if qkv_bias)
    wo_ref, bo_ref = next(it), next(it)            # [D, D] bf16, [1, D] f32
    ln2_s_ref, ln2_b_ref = next(it), next(it)      # [1, D] f32
    w1_ref, b1_ref = next(it), next(it)            # [D, 4D] bf16, [1, 4D] f32
    w2_ref, b2_ref = next(it), next(it)            # [4D, D] bf16, [1, D] f32
    o_ref = next(it)                               # [1, T, D] bf16
    ctx_ref = next(it)                             # [T, D] bf16 VMEM scratch

    x = x_ref[0].astype(f32)                       # [T, D]
    T, D = x.shape
    H = num_heads
    Dh = D // H

    # ---- LN1 + fused QKV projection (one wide MXU matmul) --------------------
    xn = _layer_norm_f32(x, ln1_s_ref[...].astype(f32), ln1_b_ref[...].astype(f32))
    qkv = jnp.dot(xn.astype(bf16), wqkv_ref[...], preferred_element_type=f32)  # [T, 3D]
    if qkv_bias:  # statically skipped when qkv_bias=False (no operand, no add)
        qkv = qkv + bqkv_ref[...].astype(f32)

    # Fold the 1/sqrt(Dh) scale into q once ([T,D]) instead of per-head [T,T].
    q_all = qkv[:, 0:D] * jnp.float32(scale)

    # ---- per-head causal attention; contexts gathered into ctx scratch -------
    # NOTE: head slices are Dh-wide (sublane-aligned, Dh % 8 == 0); at production
    # sizes prefer Dh a multiple of 128 (or a head-batched einsum, see TODO) to
    # avoid per-head lane relayouts.
    row = jax.lax.broadcasted_iota(jnp.int32, (T, T), 0)
    col = jax.lax.broadcasted_iota(jnp.int32, (T, T), 1)
    causal = col <= row

    for h in range(H):                             # static unroll over heads
        lo = h * Dh
        qh = q_all[:, lo:lo + Dh].astype(bf16)             # [T, Dh]
        kh = qkv[:, D + lo:D + lo + Dh].astype(bf16)       # [T, Dh]
        vh = qkv[:, 2 * D + lo:2 * D + lo + Dh].astype(bf16)

        s = jax.lax.dot_general(qh, kh, (((1,), (1,)), ((), ())),
                                preferred_element_type=f32)          # [T, T]
        s = jnp.where(causal, s, jnp.float32(-1e30))
        s = s - jnp.max(s, axis=-1, keepdims=True)
        p = jnp.exp(s)
        p = p / jnp.sum(p, axis=-1, keepdims=True)         # exact divide (parity)

        ctx = jnp.dot(p.astype(bf16), vh, preferred_element_type=f32)  # [T, Dh]
        ctx_ref[:, lo:lo + Dh] = ctx.astype(ctx_ref.dtype)

    # ---- ONE output projection with K=D (full MXU contraction) + residual ----
    att = jnp.dot(ctx_ref[...], wo_ref[...], preferred_element_type=f32)
    x = x + att + bo_ref[...].astype(f32)

    # ---- LN2 + FFN (GELU) + residual -----------------------------------------
    xn2 = _layer_norm_f32(x, ln2_s_ref[...].astype(f32), ln2_b_ref[...].astype(f32))
    h1 = jnp.dot(xn2.astype(bf16), w1_ref[...],
                 preferred_element_type=f32) + b1_ref[...].astype(f32)          # [T, 4D]
    g = _gelu_tanh_f32(h1)
    ff = jnp.dot(g.astype(bf16), w2_ref[...],
                 preferred_element_type=f32) + b2_ref[...].astype(f32)          # [T, D]
    x = x + ff

    o_ref[0] = x.astype(o_ref.dtype)


def pallas_transformer_block(x, blk, *, num_heads, qkv_bias=False):
    B, T, D = x.shape
    assert D % num_heads == 0
    scale = 1.0 / math.sqrt(D // num_heads)

    args = [x,
            blk["ln1_scale"].reshape(1, D), blk["ln1_shift"].reshape(1, D),
            blk["wqkv"]]
    if qkv_bias:
        args.append(blk["bqkv"].reshape(1, 3 * D))
    args += [blk["wo"], blk["bo"].reshape(1, D),
             blk["ln2_scale"].reshape(1, D), blk["ln2_shift"].reshape(1, D),
             blk["w1"], blk["b1"].reshape(1, 4 * D),
             blk["w2"], blk["b2"].reshape(1, D)]

    vmem_limit = _clamp_vmem_limit(2 * _block_vmem_estimate_bytes(T, D, num_heads))

    def build(single_buffer_params):
        # Weights/biases have grid-constant index maps -> single-buffer them so
        # they are not 2x-resident in VMEM.  Only x / o need double buffering.
        pmode = pl.Buffered(buffer_count=1) if single_buffer_params else None
        in_specs = [pl.BlockSpec((1, T, D), lambda b: (b, 0, 0))]
        in_specs += [pl.BlockSpec(a.shape, lambda b: (0, 0), pipeline_mode=pmode)
                     for a in args[1:]]
        return pl.pallas_call(
            functools.partial(transformer_block_kernel, num_heads=num_heads,
                              scale=scale, qkv_bias=qkv_bias),
            out_shape=jax.ShapeDtypeStruct((B, T, D), x.dtype),
            grid=(B,),
            in_specs=in_specs,
            out_specs=pl.BlockSpec((1, T, D), lambda b: (b, 0, 0)),
            scratch_shapes=[pltpu.VMEM((T, D), jnp.bfloat16)],
            compiler_params=pltpu.CompilerParams(
                dimension_semantics=("parallel",),
                vmem_limit_bytes=vmem_limit),
        )

    try:
        return build(True)(*args)
    except Exception:
        # Capability fallback: if this jax/libtpu rejects pipeline_mode=Buffered(1),
        # fall back to default double-buffering (correctness unaffected).
        return build(False)(*args)


# ----------------------------------------------------------------------------
# Fused final-LayerNorm + bias-free logits head.
# Grid: vocab-OUTER / token-INNER -> each w_out tile streams from HBM once and
# is reused across all token tiles; LN is recomputed per tile (negligible).
# ----------------------------------------------------------------------------

def final_norm_logits_kernel(x_ref, s_ref, b_ref, w_ref, o_ref):
    f32 = jnp.float32
    xn = _layer_norm_f32(x_ref[...].astype(f32),
                         s_ref[...].astype(f32), b_ref[...].astype(f32))
    o_ref[...] = jnp.dot(xn.astype(jnp.bfloat16), w_ref[...],
                         preferred_element_type=f32).astype(o_ref.dtype)


def pallas_final_norm_logits(x2d, scale, shift, w_out, *,
                             tm_target=256, tn_target=1024,
                             out_dtype=jnp.float32):
    # out_dtype could be bf16 to halve the N*V writeback on v5e/v6e if the
    # consumer tolerates it; default keeps f32 parity with the reference.
    N, D = x2d.shape
    V = w_out.shape[1]

    tm = min(tm_target, _round_up(N, 16))     # bf16 sublane packing: multiple of 16
    tn = min(tn_target, _round_up(V, 128))    # lane-dense vocab tile
    Np, Vp = _round_up(N, tm), _round_up(V, tn)
    if Np != N:                               # pad instead of full-dim fallback
        x2d = jnp.pad(x2d, ((0, Np - N), (0, 0)))
    if Vp != V:
        w_out = jnp.pad(w_out, ((0, 0), (0, Vp - V)))

    vmem_limit = _clamp_vmem_limit(
        2 * (2 * tm * D * 2 + 2 * D * tn * 2 + 2 * tm * tn * 4 + tm * (D + tn) * 4))

    out = pl.pallas_call(
        final_norm_logits_kernel,
        out_shape=jax.ShapeDtypeStruct((Np, Vp), out_dtype),
        grid=(Vp // tn, Np // tm),            # vocab outer, tokens inner
        in_specs=[
            pl.BlockSpec((tm, D), lambda j, i: (i, 0)),
            pl.BlockSpec((1, D), lambda j, i: (0, 0)),
            pl.BlockSpec((1, D), lambda j, i: (0, 0)),
            pl.BlockSpec((D, tn), lambda j, i: (0, j)),   # constant across inner axis
        ],
        out_specs=pl.BlockSpec((tm, tn), lambda j, i: (i, j)),
        compiler_params=pltpu.CompilerParams(
            dimension_semantics=("parallel", "arbitrary"),
            vmem_limit_bytes=vmem_limit),
    )(x2d, scale.reshape(1, D), shift.reshape(1, D), w_out)
    return out[:N, :V]


# ----------------------------------------------------------------------------
# Parameter init (deterministic, synthetic). Matmul weights stored in bf16.
# ----------------------------------------------------------------------------

def init_params(cfg, key):
    D, V, C, L = cfg["emb_dim"], cfg["vocab_size"], cfg["context_length"], cfg["n_layers"]
    qkv_bias = cfg.get("qkv_bias", False)

    def nrm(k, shape, dtype=jnp.float32):
        return (0.02 * jax.random.normal(k, shape, dtype=jnp.float32)).astype(dtype)

    keys = jax.random.split(key, 3 + L)
    params = {
        "tok_emb": nrm(keys[0], (V, D)),
        "pos_emb": nrm(keys[1], (C, D)),
        "w_out": nrm(keys[2], (D, V), jnp.bfloat16),     # out_head (bias=False)
        "lnf_scale": jnp.ones((D,), jnp.float32),
        "lnf_shift": jnp.zeros((D,), jnp.float32),
        "blocks": [],
    }
    for li in range(L):
        bk = jax.random.split(keys[3 + li], 10)
        wq, wk, wv = nrm(bk[0], (D, D)), nrm(bk[1], (D, D)), nrm(bk[2], (D, D))
        blk = {
            "ln1_scale": jnp.ones((D,), jnp.float32),
            "ln1_shift": jnp.zeros((D,), jnp.float32),
            "ln2_scale": jnp.ones((D,), jnp.float32),
            "ln2_shift": jnp.zeros((D,), jnp.float32),
            # fused QKV weight [D, 3D] (x @ W layout)
            "wqkv": jnp.concatenate([wq, wk, wv], axis=1).astype(jnp.bfloat16),
            "wo": nrm(bk[3], (D, D), jnp.bfloat16), "bo": nrm(bk[4], (D,)),
            "w1": nrm(bk[5], (D, 4 * D), jnp.bfloat16), "b1": nrm(bk[6], (4 * D,)),
            "w2": nrm(bk[7], (4 * D, D), jnp.bfloat16), "b2": nrm(bk[8], (D,)),
        }
        if qkv_bias:
            blk["bqkv"] = nrm(bk[9], (3 * D,))
        params["blocks"].append(blk)
    return params


# ----------------------------------------------------------------------------
# Forward pass
# ----------------------------------------------------------------------------

def llm_forward(params, in_idx, cfg):
    B, T = in_idx.shape
    D, H, V = cfg["emb_dim"], cfg["n_heads"], cfg["vocab_size"]
    qkv_bias = cfg.get("qkv_bias", False)

    # Embedding lookups are glue (gather) — kept in plain JAX.
    tok = params["tok_emb"][in_idx]                    # [B, T, D]
    pos = params["pos_emb"][:T]                        # [T, D]
    x = (tok + pos[None, :, :]).astype(jnp.bfloat16)   # drop_emb: identity

    for blk in params["blocks"]:
        x = pallas_transformer_block(x, blk, num_heads=H, qkv_bias=qkv_bias)

    logits = pallas_final_norm_logits(
        x.reshape(B * T, D), params["lnf_scale"], params["lnf_shift"],
        params["w_out"])
    return logits.reshape(B, T, V)


# ----------------------------------------------------------------------------
# Main
# ----------------------------------------------------------------------------

if __name__ == "__main__":
    cfg = {
        "vocab_size": 64,
        "context_length": 16,
        "emb_dim": 32,
        "n_heads": 4,
        "n_layers": 2,
        "drop_rate": 0.0,
        "qkv_bias": False,
    }

    key = jax.random.PRNGKey(0)
    pkey, ikey = jax.random.split(key)
    params = init_params(cfg, pkey)

    B, T = 2, 8
    in_idx = jax.random.randint(ikey, (B, T), 0, cfg["vocab_size"], dtype=jnp.int32)

    logits = llm_forward(params, in_idx, cfg)
    logits = jax.block_until_ready(logits)

    assert logits.shape == (B, T, cfg["vocab_size"])
    assert logits.dtype == jnp.float32
    assert bool(jnp.all(jnp.isfinite(logits)))
    print("KERNEL_OK")
</pallas_src>

<mosaic_0001>
module attributes {stable_mosaic.version = 11 : i64} {
  func.func @transformer_block_kernel(%arg0: i32, %arg1: memref<1x8x32xbf16, #tpu.memory_space<vmem>>, %arg2: memref<1x32xf32, #tpu.memory_space<vmem>>, %arg3: memref<1x32xf32, #tpu.memory_space<vmem>>, %arg4: memref<32x96xbf16, #tpu.memory_space<vmem>>, %arg5: memref<32x32xbf16, #tpu.memory_space<vmem>>, %arg6: memref<1x32xf32, #tpu.memory_space<vmem>>, %arg7: memref<1x32xf32, #tpu.memory_space<vmem>>, %arg8: memref<1x32xf32, #tpu.memory_space<vmem>>, %arg9: memref<32x128xbf16, #tpu.memory_space<vmem>>, %arg10: memref<1x128xf32, #tpu.memory_space<vmem>>, %arg11: memref<128x32xbf16, #tpu.memory_space<vmem>>, %arg12: memref<1x32xf32, #tpu.memory_space<vmem>>, %arg13: memref<1x8x32xbf16, #tpu.memory_space<vmem>>, %arg14: memref<8x32xbf16, #tpu.memory_space<vmem>>) attributes {dimension_semantics = [#tpu.dimension_semantics<parallel>], iteration_bounds = array<i64: 2>, scalar_prefetch = 0 : i64, scratch_operands = 1 : i64, tpu.core_type = #tpu.core_type<tc>, window_params = [{transform_indices = @transform_0, window_bounds = array<i64: 1, 8, 32>}, {pipeline_mode = #tpu.pipeline_mode<synchronous>, transform_indices = @transform_1, window_bounds = array<i64: 1, 32>}, {pipeline_mode = #tpu.pipeline_mode<synchronous>, transform_indices = @transform_2, window_bounds = array<i64: 1, 32>}, {pipeline_mode = #tpu.pipeline_mode<synchronous>, transform_indices = @transform_3, window_bounds = array<i64: 32, 96>}, {pipeline_mode = #tpu.pipeline_mode<synchronous>, transform_indices = @transform_4, window_bounds = array<i64: 32, 32>}, {pipeline_mode = #tpu.pipeline_mode<synchronous>, transform_indices = @transform_5, window_bounds = array<i64: 1, 32>}, {pipeline_mode = #tpu.pipeline_mode<synchronous>, transform_indices = @transform_6, window_bounds = array<i64: 1, 32>}, {pipeline_mode = #tpu.pipeline_mode<synchronous>, transform_indices = @transform_7, window_bounds = array<i64: 1, 32>}, {pipeline_mode = #tpu.pipeline_mode<synchronous>, transform_indices = @transform_8, window_bounds = array<i64: 32, 128>}, {pipeline_mode = #tpu.pipeline_mode<synchronous>, transform_indices = @transform_9, window_bounds = array<i64: 1, 128>}, {pipeline_mode = #tpu.pipeline_mode<synchronous>, transform_indices = @transform_10, window_bounds = array<i64: 128, 32>}, {pipeline_mode = #tpu.pipeline_mode<synchronous>, transform_indices = @transform_11, window_bounds = array<i64: 1, 32>}, {transform_indices = @transform_12, window_bounds = array<i64: 1, 8, 32>}]} {
    %c0 = arith.constant 0 : index
    %c0_0 = arith.constant 0 : index
    %c0_1 = arith.constant 0 : index
    %0 = vector.load %arg1[%c0, %c0_0, %c0_1] : memref<1x8x32xbf16, #tpu.memory_space<vmem>>, vector<1x8x32xbf16>
    %1 = vector.shape_cast %0 : vector<1x8x32xbf16> to vector<8x32xbf16>
    %2 = arith.extf %1 : vector<8x32xbf16> to vector<8x32xf32>
    %c0_2 = arith.constant 0 : index
    %c0_3 = arith.constant 0 : index
    %3 = vector.load %arg2[%c0_2, %c0_3] : memref<1x32xf32, #tpu.memory_space<vmem>>, vector<1x32xf32>
    %c0_4 = arith.constant 0 : index
    %c0_5 = arith.constant 0 : index
    %4 = vector.load %arg3[%c0_4, %c0_5] : memref<1x32xf32, #tpu.memory_space<vmem>>, vector<1x32xf32>
    %cst = arith.constant dense<0.000000e+00> : vector<8xf32>
    %5 = vector.multi_reduction <add>, %2, %cst [1] : vector<8x32xf32> to vector<8xf32>
    %6 = vector.shape_cast %5 : vector<8xf32> to vector<8x1xf32>
    %cst_6 = arith.constant 3.200000e+01 : f32
    %7 = vector.broadcast %cst_6 : f32 to vector<8x1xf32>
    %8 = arith.divf %6, %7 : vector<8x1xf32>
    %9 = vector.broadcast %8 : vector<8x1xf32> to vector<8x32xf32>
    %10 = arith.subf %2, %9 : vector<8x32xf32>
    %11 = arith.mulf %10, %10 : vector<8x32xf32>
    %cst_7 = arith.constant dense<0.000000e+00> : vector<8xf32>
    %12 = vector.multi_reduction <add>, %11, %cst_7 [1] : vector<8x32xf32> to vector<8xf32>
    %13 = vector.shape_cast %12 : vector<8xf32> to vector<8x1xf32>
    %cst_8 = arith.constant 3.200000e+01 : f32
    %14 = vector.broadcast %cst_8 : f32 to vector<8x1xf32>
    %15 = arith.divf %13, %14 : vector<8x1xf32>
    %16 = vector.broadcast %8 : vector<8x1xf32> to vector<8x32xf32>
    %17 = arith.subf %2, %16 : vector<8x32xf32>
    %cst_9 = arith.constant 9.99999974E-6 : f32
    %18 = vector.broadcast %cst_9 : f32 to vector<8x1xf32>
    %19 = arith.addf %15, %18 : vector<8x1xf32>
    %20 = math.rsqrt %19 : vector<8x1xf32>
    %21 = vector.broadcast %20 : vector<8x1xf32> to vector<8x32xf32>
    %22 = arith.mulf %17, %21 : vector<8x32xf32>
    %23 = vector.broadcast %3 : vector<1x32xf32> to vector<8x32xf32>
    %24 = arith.mulf %22, %23 : vector<8x32xf32>
    %25 = vector.broadcast %4 : vector<1x32xf32> to vector<8x32xf32>
    %26 = arith.addf %24, %25 : vector<8x32xf32>
    %27 = arith.truncf %26 : vector<8x32xf32> to vector<8x32xbf16>
    %c0_10 = arith.constant 0 : index
    %c0_11 = arith.constant 0 : index
    %28 = vector.load %arg4[%c0_10, %c0_11] : memref<32x96xbf16, #tpu.memory_space<vmem>>, vector<32x96xbf16>
    %cst_12 = arith.constant dense<0.000000e+00> : vector<8x96xf32>
    %29 = tpu.matmul %27, %28, %cst_12 {dimension_numbers = #tpu.dot_dimension_numbers<[1], [0], [0], [1], [0, 0, 1, 1], [], []>} : vector<8x32xbf16>, vector<32x96xbf16>, vector<8x96xf32> -> vector<8x96xf32>
    %30 = vector.extract_strided_slice %29 {offsets = [0, 0], sizes = [8, 32], strides = [1, 1]} : vector<8x96xf32> to vector<8x32xf32>
    %cst_13 = arith.constant 0.353553385 : f32
    %31 = vector.broadcast %cst_13 : f32 to vector<8x32xf32>
    %32 = arith.mulf %30, %31 : vector<8x32xf32>
    %33 = tpu.iota {dimensions = array<i32: 0>} : vector<8x8xi32>
    %34 = tpu.iota {dimensions = array<i32: 1>} : vector<8x8xi32>
    %35 = arith.cmpi sle, %34, %33 : vector<8x8xi32>
    %36 = vector.extract_strided_slice %32 {offsets = [0, 0], sizes = [8, 8], strides = [1, 1]} : vector<8x32xf32> to vector<8x8xf32>
    %37 = arith.truncf %36 : vector<8x8xf32> to vector<8x8xbf16>
    %38 = vector.extract_strided_slice %29 {offsets = [0, 32], sizes = [8, 8], strides = [1, 1]} : vector<8x96xf32> to vector<8x8xf32>
    %39 = arith.truncf %38 : vector<8x8xf32> to vector<8x8xbf16>
    %40 = vector.extract_strided_slice %29 {offsets = [0, 64], sizes = [8, 8], strides = [1, 1]} : vector<8x96xf32> to vector<8x8xf32>
    %41 = arith.truncf %40 : vector<8x8xf32> to vector<8x8xbf16>
    %cst_14 = arith.constant dense<0.000000e+00> : vector<8x8xf32>
    %42 = tpu.matmul %37, %39, %cst_14 {dimension_numbers = #tpu.dot_dimension_numbers<[1], [1], [0], [0], [0, 0, 1, 0], [], []>} : vector<8x8xbf16>, vector<8x8xbf16>, vector<8x8xf32> -> vector<8x8xf32>
    %cst_15 = arith.constant -1.000000e+30 : f32
    %43 = vector.broadcast %cst_15 : f32 to vector<8x8xf32>
    %44 = arith.select %35, %42, %43 : vector<8x8xi1>, vector<8x8xf32>
    %cst_16 = arith.constant dense<0xFF800000> : vector<8xf32>
    %45 = vector.multi_reduction <maximumf>, %44, %cst_16 [1] : vector<8x8xf32> to vector<8xf32>
    %46 = vector.shape_cast %45 : vector<8xf32> to vector<8x1xf32>
    %47 = vector.broadcast %46 : vector<8x1xf32> to vector<8x8xf32>
    %48 = arith.subf %44, %47 : vector<8x8xf32>
    %49 = math.exp %48 : vector<8x8xf32>
    %cst_17 = arith.constant dense<0.000000e+00> : vector<8xf32>
    %50 = vector.multi_reduction <add>, %49, %cst_17 [1] : vector<8x8xf32> to vector<8xf32>
    %51 = vector.shape_cast %50 : vector<8xf32> to vector<8x1xf32>
    %52 = vector.broadcast %51 : vector<8x1xf32> to vector<8x8xf32>
    %53 = arith.divf %49, %52 : vector<8x8xf32>
    %54 = arith.truncf %53 : vector<8x8xf32> to vector<8x8xbf16>
    %cst_18 = arith.constant dense<0.000000e+00> : vector<8x8xf32>
    %55 = tpu.matmul %54, %41, %cst_18 {dimension_numbers = #tpu.dot_dimension_numbers<[1], [0], [0], [1], [0, 0, 1, 1], [], []>} : vector<8x8xbf16>, vector<8x8xbf16>, vector<8x8xf32> -> vector<8x8xf32>
    %56 = arith.truncf %55 : vector<8x8xf32> to vector<8x8xbf16>
    %c0_19 = arith.constant 0 : index
    %c0_20 = arith.constant 0 : index
    %57 = vector.load %arg14[%c0_19, %c0_20] : memref<8x32xbf16, #tpu.memory_space<vmem>>, vector<8x8xbf16>
    tpu.vector_store %arg14[%c0_19, %c0_20], %56 {strides = array<i32>} : memref<8x32xbf16, #tpu.memory_space<vmem>>, vector<8x8xbf16>,
    %58 = vector.extract_strided_slice %32 {offsets = [0, 8], sizes = [8, 8], strides = [1, 1]} : vector<8x32xf32> to vector<8x8xf32>
    %59 = arith.truncf %58 : vector<8x8xf32> to vector<8x8xbf16>
    %60 = vector.extract_strided_slice %29 {offsets = [0, 40], sizes = [8, 8], strides = [1, 1]} : vector<8x96xf32> to vector<8x8xf32>
    %61 = arith.truncf %60 : vector<8x8xf32> to vector<8x8xbf16>
    %62 = vector.extract_strided_slice %29 {offsets = [0, 72], sizes = [8, 8], strides = [1, 1]} : vector<8x96xf32> to vector<8x8xf32>
    %63 = arith.truncf %62 : vector<8x8xf32> to vector<8x8xbf16>
    %cst_21 = arith.constant dense<0.000000e+00> : vector<8x8xf32>
    %64 = tpu.matmul %59, %61, %cst_21 {dimension_numbers = #tpu.dot_dimension_numbers<[1], [1], [0], [0], [0, 0, 1, 0], [], []>} : vector<8x8xbf16>, vector<8x8xbf16>, vector<8x8xf32> -> vector<8x8xf32>
    %cst_22 = arith.constant -1.000000e+30 : f32
    %65 = vector.broadcast %cst_22 : f32 to vector<8x8xf32>
    %66 = arith.select %35, %64, %65 : vector<8x8xi1>, vector<8x8xf32>
    %cst_23 = arith.constant dense<0xFF800000> : vector<8xf32>
    %67 = vector.multi_reduction <maximumf>, %66, %cst_23 [1] : vector<8x8xf32> to vector<8xf32>
    %68 = vector.shape_cast %67 : vector<8xf32> to vector<8x1xf32>
    %69 = vector.broadcast %68 : vector<8x1xf32> to vector<8x8xf32>
    %70 = arith.subf %66, %69 : vector<8x8xf32>
    %71 = math.exp %70 : vector<8x8xf32>
    %cst_24 = arith.constant dense<0.000000e+00> : vector<8xf32>
    %72 = vector.multi_reduction <add>, %71, %cst_24 [1] : vector<8x8xf32> to vector<8xf32>
    %73 = vector.shape_cast %72 : vector<8xf32> to vector<8x1xf32>
    %74 = vector.broadcast %73 : vector<8x1xf32> to vector<8x8xf32>
    %75 = arith.divf %71, %74 : vector<8x8xf32>
    %76 = arith.truncf %75 : vector<8x8xf32> to vector<8x8xbf16>
    %cst_25 = arith.constant dense<0.000000e+00> : vector<8x8xf32>
    %77 = tpu.matmul %76, %63, %cst_25 {dimension_numbers = #tpu.dot_dimension_numbers<[1], [0], [0], [1], [0, 0, 1, 1], [], []>} : vector<8x8xbf16>, vector<8x8xbf16>, vector<8x8xf32> -> vector<8x8xf32>
    %78 = arith.truncf %77 : vector<8x8xf32> to vector<8x8xbf16>
    %c0_26 = arith.constant 0 : index
    %c8 = arith.constant 8 : index
    %79 = vector.load %arg14[%c0_26, %c8] : memref<8x32xbf16, #tpu.memory_space<vmem>>, vector<8x8xbf16>
    tpu.vector_store %arg14[%c0_26, %c8], %78 {strides = array<i32>} : memref<8x32xbf16, #tpu.memory_space<vmem>>, vector<8x8xbf16>,
    %80 = vector.extract_strided_slice %32 {offsets = [0, 16], sizes = [8, 8], strides = [1, 1]} : vector<8x32xf32> to vector<8x8xf32>
    %81 = arith.truncf %80 : vector<8x8xf32> to vector<8x8xbf16>
    %82 = vector.extract_strided_slice %29 {offsets = [0, 48], sizes = [8, 8], strides = [1, 1]} : vector<8x96xf32> to vector<8x8xf32>
    %83 = arith.truncf %82 : vector<8x8xf32> to vector<8x8xbf16>
    %84 = vector.extract_strided_slice %29 {offsets = [0, 80], sizes = [8, 8], strides = [1, 1]} : vector<8x96xf32> to vector<8x8xf32>
    %85 = arith.truncf %84 : vector<8x8xf32> to vector<8x8xbf16>
    %cst_27 = arith.constant dense<0.000000e+00> : vector<8x8xf32>
    %86 = tpu.matmul %81, %83, %cst_27 {dimension_numbers = #tpu.dot_dimension_numbers<[1], [1], [0], [0], [0, 0, 1, 0], [], []>} : vector<8x8xbf16>, vector<8x8xbf16>, vector<8x8xf32> -> vector<8x8xf32>
    %cst_28 = arith.constant -1.000000e+30 : f32
    %87 = vector.broadcast %cst_28 : f32 to vector<8x8xf32>
    %88 = arith.select %35, %86, %87 : vector<8x8xi1>, vector<8x8xf32>
    %cst_29 = arith.constant dense<0xFF800000> : vector<8xf32>
    %89 = vector.multi_reduction <maximumf>, %88, %cst_29 [1] : vector<8x8xf32> to vector<8xf32>
    %90 = vector.shape_cast %89 : vector<8xf32> to vector<8x1xf32>
    %91 = vector.broadcast %90 : vector<8x1xf32> to vector<8x8xf32>
    %92 = arith.subf %88, %91 : vector<8x8xf32>
    %93 = math.exp %92 : vector<8x8xf32>
    %cst_30 = arith.constant dense<0.000000e+00> : vector<8xf32>
    %94 = vector.multi_reduction <add>, %93, %cst_30 [1] : vector<8x8xf32> to vector<8xf32>
    %95 = vector.shape_cast %94 : vector<8xf32> to vector<8x1xf32>
    %96 = vector.broadcast %95 : vector<8x1xf32> to vector<8x8xf32>
    %97 = arith.divf %93, %96 : vector<8x8xf32>
    %98 = arith.truncf %97 : vector<8x8xf32> to vector<8x8xbf16>
    %cst_31 = arith.constant dense<0.000000e+00> : vector<8x8xf32>
    %99 = tpu.matmul %98, %85, %cst_31 {dimension_numbers = #tpu.dot_dimension_numbers<[1], [0], [0], [1], [0, 0, 1, 1], [], []>} : vector<8x8xbf16>, vector<8x8xbf16>, vector<8x8xf32> -> vector<8x8xf32>
    %100 = arith.truncf %99 : vector<8x8xf32> to vector<8x8xbf16>
    %c0_32 = arith.constant 0 : index
    %c16 = arith.constant 16 : index
    %101 = vector.load %arg14[%c0_32, %c16] : memref<8x32xbf16, #tpu.memory_space<vmem>>, vector<8x8xbf16>
    tpu.vector_store %arg14[%c0_32, %c16], %100 {strides = array<i32>} : memref<8x32xbf16, #tpu.memory_space<vmem>>, vector<8x8xbf16>,
    %102 = vector.extract_strided_slice %32 {offsets = [0, 24], sizes = [8, 8], strides = [1, 1]} : vector<8x32xf32> to vector<8x8xf32>
    %103 = arith.truncf %102 : vector<8x8xf32> to vector<8x8xbf16>
    %104 = vector.extract_strided_slice %29 {offsets = [0, 56], sizes = [8, 8], strides = [1, 1]} : vector<8x96xf32> to vector<8x8xf32>
    %105 = arith.truncf %104 : vector<8x8xf32> to vector<8x8xbf16>
    %106 = vector.extract_strided_slice %29 {offsets = [0, 88], sizes = [8, 8], strides = [1, 1]} : vector<8x96xf32> to vector<8x8xf32>
    %107 = arith.truncf %106 : vector<8x8xf32> to vector<8x8xbf16>
    %cst_33 = arith.constant dense<0.000000e+00> : vector<8x8xf32>
    %108 = tpu.matmul %103, %105, %cst_33 {dimension_numbers = #tpu.dot_dimension_numbers<[1], [1], [0], [0], [0, 0, 1, 0], [], []>} : vector<8x8xbf16>, vector<8x8xbf16>, vector<8x8xf32> -> vector<8x8xf32>
    %cst_34 = arith.constant -1.000000e+30 : f32
    %109 = vector.broadcast %cst_34 : f32 to vector<8x8xf32>
    %110 = arith.select %35, %108, %109 : vector<8x8xi1>, vector<8x8xf32>
    %cst_35 = arith.constant dense<0xFF800000> : vector<8xf32>
    %111 = vector.multi_reduction <maximumf>, %110, %cst_35 [1] : vector<8x8xf32> to vector<8xf32>
    %112 = vector.shape_cast %111 : vector<8xf32> to vector<8x1xf32>
    %113 = vector.broadcast %112 : vector<8x1xf32> to vector<8x8xf32>
    %114 = arith.subf %110, %113 : vector<8x8xf32>
    %115 = math.exp %114 : vector<8x8xf32>
    %cst_36 = arith.constant dense<0.000000e+00> : vector<8xf32>
    %116 = vector.multi_reduction <add>, %115, %cst_36 [1] : vector<8x8xf32> to vector<8xf32>
    %117 = vector.shape_cast %116 : vector<8xf32> to vector<8x1xf32>
    %118 = vector.broadcast %117 : vector<8x1xf32> to vector<8x8xf32>
    %119 = arith.divf %115, %118 : vector<8x8xf32>
    %120 = arith.truncf %119 : vector<8x8xf32> to vector<8x8xbf16>
    %cst_37 = arith.constant dense<0.000000e+00> : vector<8x8xf32>
    %121 = tpu.matmul %120, %107, %cst_37 {dimension_numbers = #tpu.dot_dimension_numbers<[1], [0], [0], [1], [0, 0, 1, 1], [], []>} : vector<8x8xbf16>, vector<8x8xbf16>, vector<8x8xf32> -> vector<8x8xf32>
    %122 = arith.truncf %121 : vector<8x8xf32> to vector<8x8xbf16>
    %c0_38 = arith.constant 0 : index
    %c24 = arith.constant 24 : index
    %123 = vector.load %arg14[%c0_38, %c24] : memref<8x32xbf16, #tpu.memory_space<vmem>>, vector<8x8xbf16>
    tpu.vector_store %arg14[%c0_38, %c24], %122 {strides = array<i32>} : memref<8x32xbf16, #tpu.memory_space<vmem>>, vector<8x8xbf16>,
    %c0_39 = arith.constant 0 : index
    %c0_40 = arith.constant 0 : index
    %124 = vector.load %arg14[%c0_39, %c0_40] : memref<8x32xbf16, #tpu.memory_space<vmem>>, vector<8x32xbf16>
    %c0_41 = arith.constant 0 : index
    %c0_42 = arith.constant 0 : index
    %125 = vector.load %arg5[%c0_41, %c0_42] : memref<32x32xbf16, #tpu.memory_space<vmem>>, vector<32x32xbf16>
    %cst_43 = arith.constant dense<0.000000e+00> : vector<8x32xf32>
    %126 = tpu.matmul %124, %125, %cst_43 {dimension_numbers = #tpu.dot_dimension_numbers<[1], [0], [0], [1], [0, 0, 1, 1], [], []>} : vector<8x32xbf16>, vector<32x32xbf16>, vector<8x32xf32> -> vector<8x32xf32>
    %127 = arith.addf %2, %126 : vector<8x32xf32>
    %c0_44 = arith.constant 0 : index
    %c0_45 = arith.constant 0 : index
    %128 = vector.load %arg6[%c0_44, %c0_45] : memref<1x32xf32, #tpu.memory_space<vmem>>, vector<1x32xf32>
    %129 = vector.broadcast %128 : vector<1x32xf32> to vector<8x32xf32>
    %130 = arith.addf %127, %129 : vector<8x32xf32>
    %c0_46 = arith.constant 0 : index
    %c0_47 = arith.constant 0 : index
    %131 = vector.load %arg7[%c0_46, %c0_47] : memref<1x32xf32, #tpu.memory_space<vmem>>, vector<1x32xf32>
    %c0_48 = arith.constant 0 : index
    %c0_49 = arith.constant 0 : index
    %132 = vector.load %arg8[%c0_48, %c0_49] : memref<1x32xf32, #tpu.memory_space<vmem>>, vector<1x32xf32>
    %cst_50 = arith.constant dense<0.000000e+00> : vector<8xf32>
    %133 = vector.multi_reduction <add>, %130, %cst_50 [1] : vector<8x32xf32> to vector<8xf32>
    %134 = vector.shape_cast %133 : vector<8xf32> to vector<8x1xf32>
    %cst_51 = arith.constant 3.200000e+01 : f32
    %135 = vector.broadcast %cst_51 : f32 to vector<8x1xf32>
    %136 = arith.divf %134, %135 : vector<8x1xf32>
    %137 = vector.broadcast %136 : vector<8x1xf32> to vector<8x32xf32>
    %138 = arith.subf %130, %137 : vector<8x32xf32>
    %139 = arith.mulf %138, %138 : vector<8x32xf32>
    %cst_52 = arith.constant dense<0.000000e+00> : vector<8xf32>
    %140 = vector.multi_reduction <add>, %139, %cst_52 [1] : vector<8x32xf32> to vector<8xf32>
    %141 = vector.shape_cast %140 : vector<8xf32> to vector<8x1xf32>
    %cst_53 = arith.constant 3.200000e+01 : f32
    %142 = vector.broadcast %cst_53 : f32 to vector<8x1xf32>
    %143 = arith.divf %141, %142 : vector<8x1xf32>
    %144 = vector.broadcast %136 : vector<8x1xf32> to vector<8x32xf32>
    %145 = arith.subf %130, %144 : vector<8x32xf32>
    %cst_54 = arith.constant 9.99999974E-6 : f32
    %146 = vector.broadcast %cst_54 : f32 to vector<8x1xf32>
    %147 = arith.addf %143, %146 : vector<8x1xf32>
    %148 = math.rsqrt %147 : vector<8x1xf32>
    %149 = vector.broadcast %148 : vector<8x1xf32> to vector<8x32xf32>
    %150 = arith.mulf %145, %149 : vector<8x32xf32>
    %151 = vector.broadcast %131 : vector<1x32xf32> to vector<8x32xf32>
    %152 = arith.mulf %150, %151 : vector<8x32xf32>
    %153 = vector.broadcast %132 : vector<1x32xf32> to vector<8x32xf32>
    %154 = arith.addf %152, %153 : vector<8x32xf32>
    %155 = arith.truncf %154 : vector<8x32xf32> to vector<8x32xbf16>
    %c0_55 = arith.constant 0 : index
    %c0_56 = arith.constant 0 : index
    %156 = vector.load %arg9[%c0_55, %c0_56] : memref<32x128xbf16, #tpu.memory_space<vmem>>, vector<32x128xbf16>
    %cst_57 = arith.constant dense<0.000000e+00> : vector<8x128xf32>
    %157 = tpu.matmul %155, %156, %cst_57 {dimension_numbers = #tpu.dot_dimension_numbers<[1], [0], [0], [1], [0, 0, 1, 1], [], []>} : vector<8x32xbf16>, vector<32x128xbf16>, vector<8x128xf32> -> vector<8x128xf32>
    %c0_58 = arith.constant 0 : index
    %c0_59 = arith.constant 0 : index
    %158 = vector.load %arg10[%c0_58, %c0_59] : memref<1x128xf32, #tpu.memory_space<vmem>>, vector<1x128xf32>
    %159 = vector.broadcast %158 : vector<1x128xf32> to vector<8x128xf32>
    %160 = arith.addf %157, %159 : vector<8x128xf32>
    %cst_60 = arith.constant 5.000000e-01 : f32
    %161 = vector.broadcast %cst_60 : f32 to vector<8x128xf32>
    %162 = arith.mulf %161, %160 : vector<8x128xf32>
    %163 = arith.mulf %160, %160 : vector<8x128xf32>
    %164 = arith.mulf %160, %163 : vector<8x128xf32>
    %cst_61 = arith.constant 4.471500e-02 : f32
    %165 = vector.broadcast %cst_61 : f32 to vector<8x128xf32>
    %166 = arith.mulf %165, %164 : vector<8x128xf32>
    %167 = arith.addf %160, %166 : vector<8x128xf32>
    %cst_62 = arith.constant 0.797884583 : f32
    %168 = vector.broadcast %cst_62 : f32 to vector<8x128xf32>
    %169 = arith.mulf %168, %167 : vector<8x128xf32>
    %170 = math.tanh %169 : vector<8x128xf32>
    %cst_63 = arith.constant 1.000000e+00 : f32
    %171 = vector.broadcast %cst_63 : f32 to vector<8x128xf32>
    %172 = arith.addf %171, %170 : vector<8x128xf32>
    %173 = arith.mulf %162, %172 : vector<8x128xf32>
    %174 = arith.truncf %173 : vector<8x128xf32> to vector<8x128xbf16>
    %c0_64 = arith.constant 0 : index
    %c0_65 = arith.constant 0 : index
    %175 = vector.load %arg11[%c0_64, %c0_65] : memref<128x32xbf16, #tpu.memory_space<vmem>>, vector<128x32xbf16>
    %cst_66 = arith.constant dense<0.000000e+00> : vector<8x32xf32>
    %176 = tpu.matmul %174, %175, %cst_66 {dimension_numbers = #tpu.dot_dimension_numbers<[1], [0], [0], [1], [0, 0, 1, 1], [], []>} : vector<8x128xbf16>, vector<128x32xbf16>, vector<8x32xf32> -> vector<8x32xf32>
    %c0_67 = arith.constant 0 : index
    %c0_68 = arith.constant 0 : index
    %177 = vector.load %arg12[%c0_67, %c0_68] : memref<1x32xf32, #tpu.memory_space<vmem>>, vector<1x32xf32>
    %178 = vector.broadcast %177 : vector<1x32xf32> to vector<8x32xf32>
    %179 = arith.addf %176, %178 : vector<8x32xf32>
    %180 = arith.addf %130, %179 : vector<8x32xf32>
    %181 = arith.truncf %180 : vector<8x32xf32> to vector<8x32xbf16>
    %c0_69 = arith.constant 0 : index
    %c0_70 = arith.constant 0 : index
    %c0_71 = arith.constant 0 : index
    %182 = vector.load %arg13[%c0_69, %c0_70, %c0_71] : memref<1x8x32xbf16, #tpu.memory_space<vmem>>, vector<1x8x32xbf16>
    %183 = vector.shape_cast %182 : vector<1x8x32xbf16> to vector<8x32xbf16>
    %184 = vector.shape_cast %181 : vector<8x32xbf16> to vector<1x8x32xbf16>
    tpu.vector_store %arg13[%c0_69, %c0_70, %c0_71], %184 {strides = array<i32>} : memref<1x8x32xbf16, #tpu.memory_space<vmem>>, vector<1x8x32xbf16>,
    return
  }
  func.func @transform_0(%arg0: i32) -> (i32, i32, i32) {
    %c0_i32 = arith.constant 0 : i32
    %c0_i32_0 = arith.constant 0 : i32
    %c0_i32_1 = arith.constant 0 : i32
    return %arg0, %c0_i32, %c0_i32_0 : i32, i32, i32
  }
  func.func @transform_1(%arg0: i32) -> (i32, i32) {
    %c0_i32 = arith.constant 0 : i32
    %c0_i32_0 = arith.constant 0 : i32
    %c0_i32_1 = arith.constant 0 : i32
    return %c0_i32, %c0_i32_0 : i32, i32
  }
  func.func @transform_2(%arg0: i32) -> (i32, i32) {
    %c0_i32 = arith.constant 0 : i32
    %c0_i32_0 = arith.constant 0 : i32
    %c0_i32_1 = arith.constant 0 : i32
    return %c0_i32, %c0_i32_0 : i32, i32
  }
  func.func @transform_3(%arg0: i32) -> (i32, i32) {
    %c0_i32 = arith.constant 0 : i32
    %c0_i32_0 = arith.constant 0 : i32
    %c0_i32_1 = arith.constant 0 : i32
    return %c0_i32, %c0_i32_0 : i32, i32
  }
  func.func @transform_4(%arg0: i32) -> (i32, i32) {
    %c0_i32 = arith.constant 0 : i32
    %c0_i32_0 = arith.constant 0 : i32
    %c0_i32_1 = arith.constant 0 : i32
    return %c0_i32, %c0_i32_0 : i32, i32
  }
  func.func @transform_5(%arg0: i32) -> (i32, i32) {
    %c0_i32 = arith.constant 0 : i32
    %c0_i32_0 = arith.constant 0 : i32
    %c0_i32_1 = arith.constant 0 : i32
    return %c0_i32, %c0_i32_0 : i32, i32
  }
  func.func @transform_6(%arg0: i32) -> (i32, i32) {
    %c0_i32 = arith.constant 0 : i32
    %c0_i32_0 = arith.constant 0 : i32
    %c0_i32_1 = arith.constant 0 : i32
    return %c0_i32, %c0_i32_0 : i32, i32
  }
  func.func @transform_7(%arg0: i32) -> (i32, i32) {
    %c0_i32 = arith.constant 0 : i32
    %c0_i32_0 = arith.constant 0 : i32
    %c0_i32_1 = arith.constant 0 : i32
    return %c0_i32, %c0_i32_0 : i32, i32
  }
  func.func @transform_8(%arg0: i32) -> (i32, i32) {
    %c0_i32 = arith.constant 0 : i32
    %c0_i32_0 = arith.constant 0 : i32
    %c0_i32_1 = arith.constant 0 : i32
    return %c0_i32, %c0_i32_0 : i32, i32
  }
  func.func @transform_9(%arg0: i32) -> (i32, i32) {
    %c0_i32 = arith.constant 0 : i32
    %c0_i32_0 = arith.constant 0 : i32
    %c0_i32_1 = arith.constant 0 : i32
    return %c0_i32, %c0_i32_0 : i32, i32
  }
  func.func @transform_10(%arg0: i32) -> (i32, i32) {
    %c0_i32 = arith.constant 0 : i32
    %c0_i32_0 = arith.constant 0 : i32
    %c0_i32_1 = arith.constant 0 : i32
    return %c0_i32, %c0_i32_0 : i32, i32
  }
  func.func @transform_11(%arg0: i32) -> (i32, i32) {
    %c0_i32 = arith.constant 0 : i32
    %c0_i32_0 = arith.constant 0 : i32
    %c0_i32_1 = arith.constant 0 : i32
    return %c0_i32, %c0_i32_0 : i32, i32
  }
  func.func @transform_12(%arg0: i32) -> (i32, i32, i32) {
    %c0_i32 = arith.constant 0 : i32
    %c0_i32_0 = arith.constant 0 : i32
    %c0_i32_1 = arith.constant 0 : i32
    return %arg0, %c0_i32, %c0_i32_0 : i32, i32, i32
  }
}

module attributes {stable_mosaic.version = 11 : i64} {
  func.func @transformer_block_kernel(%arg0: i32, %arg1: memref<1x8x32xbf16, #tpu.memory_space<vmem>>, %arg2: memref<1x32xf32, #tpu.memory_space<vmem>>, %arg3: memref<1x32xf32, #tpu.memory_space<vmem>>, %arg4: memref<32x96xbf16, #tpu.memory_space<vmem>>, %arg5: memref<32x32xbf16, #tpu.memory_space<vmem>>, %arg6: memref<1x32xf32, #tpu.memory_space<vmem>>, %arg7: memref<1x32xf32, #tpu.memory_space<vmem>>, %arg8: memref<1x32xf32, #tpu.memory_space<vmem>>, %arg9: memref<32x128xbf16, #tpu.memory_space<vmem>>, %arg10: memref<1x128xf32, #tpu.memory_space<vmem>>, %arg11: memref<128x32xbf16, #tpu.memory_space<vmem>>, %arg12: memref<1x32xf32, #tpu.memory_space<vmem>>, %arg13: memref<1x8x32xbf16, #tpu.memory_space<vmem>>, %arg14: memref<8x32xbf16, #tpu.memory_space<vmem>>) attributes {dimension_semantics = [#tpu.dimension_semantics<parallel>], iteration_bounds = array<i64: 2>, scalar_prefetch = 0 : i64, scratch_operands = 1 : i64, tpu.core_type = #tpu.core_type<tc>, window_params = [{transform_indices = @transform_0, window_bounds = array<i64: 1, 8, 32>}, {pipeline_mode = #tpu.pipeline_mode<synchronous>, transform_indices = @transform_1, window_bounds = array<i64: 1, 32>}, {pipeline_mode = #tpu.pipeline_mode<synchronous>, transform_indices = @transform_2, window_bounds = array<i64: 1, 32>}, {pipeline_mode = #tpu.pipeline_mode<synchronous>, transform_indices = @transform_3, window_bounds = array<i64: 32, 96>}, {pipeline_mode = #tpu.pipeline_mode<synchronous>, transform_indices = @transform_4, window_bounds = array<i64: 32, 32>}, {pipeline_mode = #tpu.pipeline_mode<synchronous>, transform_indices = @transform_5, window_bounds = array<i64: 1, 32>}, {pipeline_mode = #tpu.pipeline_mode<synchronous>, transform_indices = @transform_6, window_bounds = array<i64: 1, 32>}, {pipeline_mode = #tpu.pipeline_mode<synchronous>, transform_indices = @transform_7, window_bounds = array<i64: 1, 32>}, {pipeline_mode = #tpu.pipeline_mode<synchronous>, transform_indices = @transform_8, window_bounds = array<i64: 32, 128>}, {pipeline_mode = #tpu.pipeline_mode<synchronous>, transform_indices = @transform_9, window_bounds = array<i64: 1, 128>}, {pipeline_mode = #tpu.pipeline_mode<synchronous>, transform_indices = @transform_10, window_bounds = array<i64: 128, 32>}, {pipeline_mode = #tpu.pipeline_mode<synchronous>, transform_indices = @transform_11, window_bounds = array<i64: 1, 32>}, {transform_indices = @transform_12, window_bounds = array<i64: 1, 8, 32>}]} {
    %c0 = arith.constant 0 : index
    %c0_0 = arith.constant 0 : index
    %c0_1 = arith.constant 0 : index
    %0 = vector.load %arg1[%c0, %c0_0, %c0_1] : memref<1x8x32xbf16, #tpu.memory_space<vmem>>, vector<1x8x32xbf16>
    %1 = vector.shape_cast %0 : vector<1x8x32xbf16> to vector<8x32xbf16>
    %2 = arith.extf %1 : vector<8x32xbf16> to vector<8x32xf32>
    %c0_2 = arith.constant 0 : index
    %c0_3 = arith.constant 0 : index
    %3 = vector.load %arg2[%c0_2, %c0_3] : memref<1x32xf32, #tpu.memory_space<vmem>>, vector<1x32xf32>
    %c0_4 = arith.constant 0 : index
    %c0_5 = arith.constant 0 : index
    %4 = vector.load %arg3[%c0_4, %c0_5] : memref<1x32xf32, #tpu.memory_space<vmem>>, vector<1x32xf32>
    %cst = arith.constant dense<0.000000e+00> : vector<8xf32>
    %5 = vector.multi_reduction <add>, %2, %cst [1] : vector<8x32xf32> to vector<8xf32>
    %6 = vector.shape_cast %5 : vector<8xf32> to vector<8x1xf32>
    %cst_6 = arith.constant 3.200000e+01 : f32
    %7 = vector.broadcast %cst_6 : f32 to vector<8x1xf32>
    %8 = arith.divf %6, %7 : vector<8x1xf32>
    %9 = vector.broadcast %8 : vector<8x1xf32> to vector<8x32xf32>
    %10 = arith.subf %2, %9 : vector<8x32xf32>
    %11 = arith.mulf %10, %10 : vector<8x32xf32>
    %cst_7 = arith.constant dense<0.000000e+00> : vector<8xf32>
    %12 = vector.multi_reduction <add>, %11, %cst_7 [1] : vector<8x32xf32> to vector<8xf32>
    %13 = vector.shape_cast %12 : vector<8xf32> to vector<8x1xf32>
    %cst_8 = arith.constant 3.200000e+01 : f32
    %14 = vector.broadcast %cst_8 : f32 to vector<8x1xf32>
    %15 = arith.divf %13, %14 : vector<8x1xf32>
    %16 = vector.broadcast %8 : vector<8x1xf32> to vector<8x32xf32>
    %17 = arith.subf %2, %16 : vector<8x32xf32>
    %cst_9 = arith.constant 9.99999974E-6 : f32
    %18 = vector.broadcast %cst_9 : f32 to vector<8x1xf32>
    %19 = arith.addf %15, %18 : vector<8x1xf32>
    %20 = math.rsqrt %19 : vector<8x1xf32>
    %21 = vector.broadcast %20 : vector<8x1xf32> to vector<8x32xf32>
    %22 = arith.mulf %17, %21 : vector<8x32xf32>
    %23 = vector.broadcast %3 : vector<1x32xf32> to vector<8x32xf32>
    %24 = arith.mulf %22, %23 : vector<8x32xf32>
    %25 = vector.broadcast %4 : vector<1x32xf32> to vector<8x32xf32>
    %26 = arith.addf %24, %25 : vector<8x32xf32>
    %27 = arith.truncf %26 : vector<8x32xf32> to vector<8x32xbf16>
    %c0_10 = arith.constant 0 : index
    %c0_11 = arith.constant 0 : index
    %28 = vector.load %arg4[%c0_10, %c0_11] : memref<32x96xbf16, #tpu.memory_space<vmem>>, vector<32x96xbf16>
    %cst_12 = arith.constant dense<0.000000e+00> : vector<8x96xf32>
    %29 = tpu.matmul %27, %28, %cst_12 {dimension_numbers = #tpu.dot_dimension_numbers<[1], [0], [0], [1], [0, 0, 1, 1], [], []>} : vector<8x32xbf16>, vector<32x96xbf16>, vector<8x96xf32> -> vector<8x96xf32>
    %30 = vector.extract_strided_slice %29 {offsets = [0, 0], sizes = [8, 32], strides = [1, 1]} : vector<8x96xf32> to vector<8x32xf32>
    %cst_13 = arith.constant 0.353553385 : f32
    %31 = vector.broadcast %cst_13 : f32 to vector<8x32xf32>
    %32 = arith.mulf %30, %31 : vector<8x32xf32>
    %33 = tpu.iota {dimensions = array<i32: 0>} : vector<8x8xi32>
    %34 = tpu.iota {dimensions = array<i32: 1>} : vector<8x8xi32>
    %35 = arith.cmpi sle, %34, %33 : vector<8x8xi32>
    %36 = vector.extract_strided_slice %32 {offsets = [0, 0], sizes = [8, 8], strides = [1, 1]} : vector<8x32xf32> to vector<8x8xf32>
    %37 = arith.truncf %36 : vector<8x8xf32> to vector<8x8xbf16>
    %38 = vector.extract_strided_slice %29 {offsets = [0, 32], sizes = [8, 8], strides = [1, 1]} : vector<8x96xf32> to vector<8x8xf32>
    %39 = arith.truncf %38 : vector<8x8xf32> to vector<8x8xbf16>
    %40 = vector.extract_strided_slice %29 {offsets = [0, 64], sizes = [8, 8], strides = [1, 1]} : vector<8x96xf32> to vector<8x8xf32>
    %41 = arith.truncf %40 : vector<8x8xf32> to vector<8x8xbf16>
    %cst_14 = arith.constant dense<0.000000e+00> : vector<8x8xf32>
    %42 = tpu.matmul %37, %39, %cst_14 {dimension_numbers = #tpu.dot_dimension_numbers<[1], [1], [0], [0], [0, 0, 1, 0], [], []>} : vector<8x8xbf16>, vector<8x8xbf16>, vector<8x8xf32> -> vector<8x8xf32>
    %cst_15 = arith.constant -1.000000e+30 : f32
    %43 = vector.broadcast %cst_15 : f32 to vector<8x8xf32>
    %44 = arith.select %35, %42, %43 : vector<8x8xi1>, vector<8x8xf32>
    %cst_16 = arith.constant dense<0xFF800000> : vector<8xf32>
    %45 = vector.multi_reduction <maximumf>, %44, %cst_16 [1] : vector<8x8xf32> to vector<8xf32>
    %46 = vector.shape_cast %45 : vector<8xf32> to vector<8x1xf32>
    %47 = vector.broadcast %46 : vector<8x1xf32> to vector<8x8xf32>
    %48 = arith.subf %44, %47 : vector<8x8xf32>
    %49 = math.exp %48 : vector<8x8xf32>
    %cst_17 = arith.constant dense<0.000000e+00> : vector<8xf32>
    %50 = vector.multi_reduction <add>, %49, %cst_17 [1] : vector<8x8xf32> to vector<8xf32>
    %51 = vector.shape_cast %50 : vector<8xf32> to vector<8x1xf32>
    %52 = vector.broadcast %51 : vector<8x1xf32> to vector<8x8xf32>
    %53 = arith.divf %49, %52 : vector<8x8xf32>
    %54 = arith.truncf %53 : vector<8x8xf32> to vector<8x8xbf16>
    %cst_18 = arith.constant dense<0.000000e+00> : vector<8x8xf32>
    %55 = tpu.matmul %54, %41, %cst_18 {dimension_numbers = #tpu.dot_dimension_numbers<[1], [0], [0], [1], [0, 0, 1, 1], [], []>} : vector<8x8xbf16>, vector<8x8xbf16>, vector<8x8xf32> -> vector<8x8xf32>
    %56 = arith.truncf %55 : vector<8x8xf32> to vector<8x8xbf16>
    %c0_19 = arith.constant 0 : index
    %c0_20 = arith.constant 0 : index
    %57 = vector.load %arg14[%c0_19, %c0_20] : memref<8x32xbf16, #tpu.memory_space<vmem>>, vector<8x8xbf16>
    tpu.vector_store %arg14[%c0_19, %c0_20], %56 {strides = array<i32>} : memref<8x32xbf16, #tpu.memory_space<vmem>>, vector<8x8xbf16>,
    %58 = vector.extract_strided_slice %32 {offsets = [0, 8], sizes = [8, 8], strides = [1, 1]} : vector<8x32xf32> to vector<8x8xf32>
    %59 = arith.truncf %58 : vector<8x8xf32> to vector<8x8xbf16>
    %60 = vector.extract_strided_slice %29 {offsets = [0, 40], sizes = [8, 8], strides = [1, 1]} : vector<8x96xf32> to vector<8x8xf32>
    %61 = arith.truncf %60 : vector<8x8xf32> to vector<8x8xbf16>
    %62 = vector.extract_strided_slice %29 {offsets = [0, 72], sizes = [8, 8], strides = [1, 1]} : vector<8x96xf32> to vector<8x8xf32>
    %63 = arith.truncf %62 : vector<8x8xf32> to vector<8x8xbf16>
    %cst_21 = arith.constant dense<0.000000e+00> : vector<8x8xf32>
    %64 = tpu.matmul %59, %61, %cst_21 {dimension_numbers = #tpu.dot_dimension_numbers<[1], [1], [0], [0], [0, 0, 1, 0], [], []>} : vector<8x8xbf16>, vector<8x8xbf16>, vector<8x8xf32> -> vector<8x8xf32>
    %cst_22 = arith.constant -1.000000e+30 : f32
    %65 = vector.broadcast %cst_22 : f32 to vector<8x8xf32>
    %66 = arith.select %35, %64, %65 : vector<8x8xi1>, vector<8x8xf32>
    %cst_23 = arith.constant dense<0xFF800000> : vector<8xf32>
    %67 = vector.multi_reduction <maximumf>, %66, %cst_23 [1] : vector<8x8xf32> to vector<8xf32>
    %68 = vector.shape_cast %67 : vector<8xf32> to vector<8x1xf32>
    %69 = vector.broadcast %68 : vector<8x1xf32> to vector<8x8xf32>
    %70 = arith.subf %66, %69 : vector<8x8xf32>
    %71 = math.exp %70 : vector<8x8xf32>
    %cst_24 = arith.constant dense<0.000000e+00> : vector<8xf32>
    %72 = vector.multi_reduction <add>, %71, %cst_24 [1] : vector<8x8xf32> to vector<8xf32>
    %73 = vector.shape_cast %72 : vector<8xf32> to vector<8x1xf32>
    %74 = vector.broadcast %73 : vector<8x1xf32> to vector<8x8xf32>
    %75 = arith.divf %71, %74 : vector<8x8xf32>
    %76 = arith.truncf %75 : vector<8x8xf32> to vector<8x8xbf16>
    %cst_25 = arith.constant dense<0.000000e+00> : vector<8x8xf32>
    %77 = tpu.matmul %76, %63, %cst_25 {dimension_numbers = #tpu.dot_dimension_numbers<[1], [0], [0], [1], [0, 0, 1, 1], [], []>} : vector<8x8xbf16>, vector<8x8xbf16>, vector<8x8xf32> -> vector<8x8xf32>
    %78 = arith.truncf %77 : vector<8x8xf32> to vector<8x8xbf16>
    %c0_26 = arith.constant 0 : index
    %c8 = arith.constant 8 : index
    %79 = vector.load %arg14[%c0_26, %c8] : memref<8x32xbf16, #tpu.memory_space<vmem>>, vector<8x8xbf16>
    tpu.vector_store %arg14[%c0_26, %c8], %78 {strides = array<i32>} : memref<8x32xbf16, #tpu.memory_space<vmem>>, vector<8x8xbf16>,
    %80 = vector.extract_strided_slice %32 {offsets = [0, 16], sizes = [8, 8], strides = [1, 1]} : vector<8x32xf32> to vector<8x8xf32>
    %81 = arith.truncf %80 : vector<8x8xf32> to vector<8x8xbf16>
    %82 = vector.extract_strided_slice %29 {offsets = [0, 48], sizes = [8, 8], strides = [1, 1]} : vector<8x96xf32> to vector<8x8xf32>
    %83 = arith.truncf %82 : vector<8x8xf32> to vector<8x8xbf16>
    %84 = vector.extract_strided_slice %29 {offsets = [0, 80], sizes = [8, 8], strides = [1, 1]} : vector<8x96xf32> to vector<8x8xf32>
    %85 = arith.truncf %84 : vector<8x8xf32> to vector<8x8xbf16>
    %cst_27 = arith.constant dense<0.000000e+00> : vector<8x8xf32>
    %86 = tpu.matmul %81, %83, %cst_27 {dimension_numbers = #tpu.dot_dimension_numbers<[1], [1], [0], [0], [0, 0, 1, 0], [], []>} : vector<8x8xbf16>, vector<8x8xbf16>, vector<8x8xf32> -> vector<8x8xf32>
    %cst_28 = arith.constant -1.000000e+30 : f32
    %87 = vector.broadcast %cst_28 : f32 to vector<8x8xf32>
    %88 = arith.select %35, %86, %87 : vector<8x8xi1>, vector<8x8xf32>
    %cst_29 = arith.constant dense<0xFF800000> : vector<8xf32>
    %89 = vector.multi_reduction <maximumf>, %88, %cst_29 [1] : vector<8x8xf32> to vector<8xf32>
    %90 = vector.shape_cast %89 : vector<8xf32> to vector<8x1xf32>
    %91 = vector.broadcast %90 : vector<8x1xf32> to vector<8x8xf32>
    %92 = arith.subf %88, %91 : vector<8x8xf32>
    %93 = math.exp %92 : vector<8x8xf32>
    %cst_30 = arith.constant dense<0.000000e+00> : vector<8xf32>
    %94 = vector.multi_reduction <add>, %93, %cst_30 [1] : vector<8x8xf32> to vector<8xf32>
    %95 = vector.shape_cast %94 : vector<8xf32> to vector<8x1xf32>
    %96 = vector.broadcast %95 : vector<8x1xf32> to vector<8x8xf32>
    %97 = arith.divf %93, %96 : vector<8x8xf32>
    %98 = arith.truncf %97 : vector<8x8xf32> to vector<8x8xbf16>
    %cst_31 = arith.constant dense<0.000000e+00> : vector<8x8xf32>
    %99 = tpu.matmul %98, %85, %cst_31 {dimension_numbers = #tpu.dot_dimension_numbers<[1], [0], [0], [1], [0, 0, 1, 1], [], []>} : vector<8x8xbf16>, vector<8x8xbf16>, vector<8x8xf32> -> vector<8x8xf32>
    %100 = arith.truncf %99 : vector<8x8xf32> to vector<8x8xbf16>
    %c0_32 = arith.constant 0 : index
    %c16 = arith.constant 16 : index
    %101 = vector.load %arg14[%c0_32, %c16] : memref<8x32xbf16, #tpu.memory_space<vmem>>, vector<8x8xbf16>
    tpu.vector_store %arg14[%c0_32, %c16], %100 {strides = array<i32>} : memref<8x32xbf16, #tpu.memory_space<vmem>>, vector<8x8xbf16>,
    %102 = vector.extract_strided_slice %32 {offsets = [0, 24], sizes = [8, 8], strides = [1, 1]} : vector<8x32xf32> to vector<8x8xf32>
    %103 = arith.truncf %102 : vector<8x8xf32> to vector<8x8xbf16>
    %104 = vector.extract_strided_slice %29 {offsets = [0, 56], sizes = [8, 8], strides = [1, 1]} : vector<8x96xf32> to vector<8x8xf32>
    %105 = arith.truncf %104 : vector<8x8xf32> to vector<8x8xbf16>
    %106 = vector.extract_strided_slice %29 {offsets = [0, 88], sizes = [8, 8], strides = [1, 1]} : vector<8x96xf32> to vector<8x8xf32>
    %107 = arith.truncf %106 : vector<8x8xf32> to vector<8x8xbf16>
    %cst_33 = arith.constant dense<0.000000e+00> : vector<8x8xf32>
    %108 = tpu.matmul %103, %105, %cst_33 {dimension_numbers = #tpu.dot_dimension_numbers<[1], [1], [0], [0], [0, 0, 1, 0], [], []>} : vector<8x8xbf16>, vector<8x8xbf16>, vector<8x8xf32> -> vector<8x8xf32>
    %cst_34 = arith.constant -1.000000e+30 : f32
    %109 = vector.broadcast %cst_34 : f32 to vector<8x8xf32>
    %110 = arith.select %35, %108, %109 : vector<8x8xi1>, vector<8x8xf32>
    %cst_35 = arith.constant dense<0xFF800000> : vector<8xf32>
    %111 = vector.multi_reduction <maximumf>, %110, %cst_35 [1] : vector<8x8xf32> to vector<8xf32>
    %112 = vector.shape_cast %111 : vector<8xf32> to vector<8x1xf32>
    %113 = vector.broadcast %112 : vector<8x1xf32> to vector<8x8xf32>
    %114 = arith.subf %110, %113 : vector<8x8xf32>
    %115 = math.exp %114 : vector<8x8xf32>
    %cst_36 = arith.constant dense<0.000000e+00> : vector<8xf32>
    %116 = vector.multi_reduction <add>, %115, %cst_36 [1] : vector<8x8xf32> to vector<8xf32>
    %117 = vector.shape_cast %116 : vector<8xf32> to vector<8x1xf32>
    %118 = vector.broadcast %117 : vector<8x1xf32> to vector<8x8xf32>
    %119 = arith.divf %115, %118 : vector<8x8xf32>
    %120 = arith.truncf %119 : vector<8x8xf32> to vector<8x8xbf16>
    %cst_37 = arith.constant dense<0.000000e+00> : vector<8x8xf32>
    %121 = tpu.matmul %120, %107, %cst_37 {dimension_numbers = #tpu.dot_dimension_numbers<[1], [0], [0], [1], [0, 0, 1, 1], [], []>} : vector<8x8xbf16>, vector<8x8xbf16>, vector<8x8xf32> -> vector<8x8xf32>
    %122 = arith.truncf %121 : vector<8x8xf32> to vector<8x8xbf16>
    %c0_38 = arith.constant 0 : index
    %c24 = arith.constant 24 : index
    %123 = vector.load %arg14[%c0_38, %c24] : memref<8x32xbf16, #tpu.memory_space<vmem>>, vector<8x8xbf16>
    tpu.vector_store %arg14[%c0_38, %c24], %122 {strides = array<i32>} : memref<8x32xbf16, #tpu.memory_space<vmem>>, vector<8x8xbf16>,
    %c0_39 = arith.constant 0 : index
    %c0_40 = arith.constant 0 : index
    %124 = vector.load %arg14[%c0_39, %c0_40] : memref<8x32xbf16, #tpu.memory_space<vmem>>, vector<8x32xbf16>
    %c0_41 = arith.constant 0 : index
    %c0_42 = arith.constant 0 : index
    %125 = vector.load %arg5[%c0_41, %c0_42] : memref<32x32xbf16, #tpu.memory_space<vmem>>, vector<32x32xbf16>
    %cst_43 = arith.constant dense<0.000000e+00> : vector<8x32xf32>
    %126 = tpu.matmul %124, %125, %cst_43 {dimension_numbers = #tpu.dot_dimension_numbers<[1], [0], [0], [1], [0, 0, 1, 1], [], []>} : vector<8x32xbf16>, vector<32x32xbf16>, vector<8x32xf32> -> vector<8x32xf32>
    %127 = arith.addf %2, %126 : vector<8x32xf32>
    %c0_44 = arith.constant 0 : index
    %c0_45 = arith.constant 0 : index
    %128 = vector.load %arg6[%c0_44, %c0_45] : memref<1x32xf32, #tpu.memory_space<vmem>>, vector<1x32xf32>
    %129 = vector.broadcast %128 : vector<1x32xf32> to vector<8x32xf32>
    %130 = arith.addf %127, %129 : vector<8x32xf32>
    %c0_46 = arith.constant 0 : index
    %c0_47 = arith.constant 0 : index
    %131 = vector.load %arg7[%c0_46, %c0_47] : memref<1x32xf32, #tpu.memory_space<vmem>>, vector<1x32xf32>
    %c0_48 = arith.constant 0 : index
    %c0_49 = arith.constant 0 : index
    %132 = vector.load %arg8[%c0_48, %c0_49] : memref<1x32xf32, #tpu.memory_space<vmem>>, vector<1x32xf32>
    %cst_50 = arith.constant dense<0.000000e+00> : vector<8xf32>
    %133 = vector.multi_reduction <add>, %130, %cst_50 [1] : vector<8x32xf32> to vector<8xf32>
    %134 = vector.shape_cast %133 : vector<8xf32> to vector<8x1xf32>
    %cst_51 = arith.constant 3.200000e+01 : f32
    %135 = vector.broadcast %cst_51 : f32 to vector<8x1xf32>
    %136 = arith.divf %134, %135 : vector<8x1xf32>
    %137 = vector.broadcast %136 : vector<8x1xf32> to vector<8x32xf32>
    %138 = arith.subf %130, %137 : vector<8x32xf32>
    %139 = arith.mulf %138, %138 : vector<8x32xf32>
    %cst_52 = arith.constant dense<0.000000e+00> : vector<8xf32>
    %140 = vector.multi_reduction <add>, %139, %cst_52 [1] : vector<8x32xf32> to vector<8xf32>
    %141 = vector.shape_cast %140 : vector<8xf32> to vector<8x1xf32>
    %cst_53 = arith.constant 3.200000e+01 : f32
    %142 = vector.broadcast %cst_53 : f32 to vector<8x1xf32>
    %143 = arith.divf %141, %142 : vector<8x1xf32>
    %144 = vector.broadcast %136 : vector<8x1xf32> to vector<8x32xf32>
    %145 = arith.subf %130, %144 : vector<8x32xf32>
    %cst_54 = arith.constant 9.99999974E-6 : f32
    %146 = vector.broadcast %cst_54 : f32 to vector<8x1xf32>
    %147 = arith.addf %143, %146 : vector<8x1xf32>
    %148 = math.rsqrt %147 : vector<8x1xf32>
    %149 = vector.broadcast %148 : vector<8x1xf32> to vector<8x32xf32>
    %150 = arith.mulf %145, %149 : vector<8x32xf32>
    %151 = vector.broadcast %131 : vector<1x32xf32> to vector<8x32xf32>
    %152 = arith.mulf %150, %151 : vector<8x32xf32>
    %153 = vector.broadcast %132 : vector<1x32xf32> to vector<8x32xf32>
    %154 = arith.addf %152, %153 : vector<8x32xf32>
    %155 = arith.truncf %154 : vector<8x32xf32> to vector<8x32xbf16>
    %c0_55 = arith.constant 0 : index
    %c0_56 = arith.constant 0 : index
    %156 = vector.load %arg9[%c0_55, %c0_56] : memref<32x128xbf16, #tpu.memory_space<vmem>>, vector<32x128xbf16>
    %cst_57 = arith.constant dense<0.000000e+00> : vector<8x128xf32>
    %157 = tpu.matmul %155, %156, %cst_57 {dimension_numbers = #tpu.dot_dimension_numbers<[1], [0], [0], [1], [0, 0, 1, 1], [], []>} : vector<8x32xbf16>, vector<32x128xbf16>, vector<8x128xf32> -> vector<8x128xf32>
    %c0_58 = arith.constant 0 : index
    %c0_59 = arith.constant 0 : index
    %158 = vector.load %arg10[%c0_58, %c0_59] : memref<1x128xf32, #tpu.memory_space<vmem>>, vector<1x128xf32>
    %159 = vector.broadcast %158 : vector<1x128xf32> to vector<8x128xf32>
    %160 = arith.addf %157, %159 : vector<8x128xf32>
    %cst_60 = arith.constant 5.000000e-01 : f32
    %161 = vector.broadcast %cst_60 : f32 to vector<8x128xf32>
    %162 = arith.mulf %161, %160 : vector<8x128xf32>
    %163 = arith.mulf %160, %160 : vector<8x128xf32>
    %164 = arith.mulf %160, %163 : vector<8x128xf32>
    %cst_61 = arith.constant 4.471500e-02 : f32
    %165 = vector.broadcast %cst_61 : f32 to vector<8x128xf32>
    %166 = arith.mulf %165, %164 : vector<8x128xf32>
    %167 = arith.addf %160, %166 : vector<8x128xf32>
    %cst_62 = arith.constant 0.797884583 : f32
    %168 = vector.broadcast %cst_62 : f32 to vector<8x128xf32>
    %169 = arith.mulf %168, %167 : vector<8x128xf32>
    %170 = math.tanh %169 : vector<8x128xf32>
    %cst_63 = arith.constant 1.000000e+00 : f32
    %171 = vector.broadcast %cst_63 : f32 to vector<8x128xf32>
    %172 = arith.addf %171, %170 : vector<8x128xf32>
    %173 = arith.mulf %162, %172 : vector<8x128xf32>
    %174 = arith.truncf %173 : vector<8x128xf32> to vector<8x128xbf16>
    %c0_64 = arith.constant 0 : index
    %c0_65 = arith.constant 0 : index
    %175 = vector.load %arg11[%c0_64, %c0_65] : memref<128x32xbf16, #tpu.memory_space<vmem>>, vector<128x32xbf16>
    %cst_66 = arith.constant dense<0.000000e+00> : vector<8x32xf32>
    %176 = tpu.matmul %174, %175, %cst_66 {dimension_numbers = #tpu.dot_dimension_numbers<[1], [0], [0], [1], [0, 0, 1, 1], [], []>} : vector<8x128xbf16>, vector<128x32xbf16>, vector<8x32xf32> -> vector<8x32xf32>
    %c0_67 = arith.constant 0 : index
    %c0_68 = arith.constant 0 : index
    %177 = vector.load %arg12[%c0_67, %c0_68] : memref<1x32xf32, #tpu.memory_space<vmem>>, vector<1x32xf32>
    %178 = vector.broadcast %177 : vector<1x32xf32> to vector<8x32xf32>
    %179 = arith.addf %176, %178 : vector<8x32xf32>
    %180 = arith.addf %130, %179 : vector<8x32xf32>
    %181 = arith.truncf %180 : vector<8x32xf32> to vector<8x32xbf16>
    %c0_69 = arith.constant 0 : index
    %c0_70 = arith.constant 0 : index
    %c0_71 = arith.constant 0 : index
    %182 = vector.load %arg13[%c0_69, %c0_70, %c0_71] : memref<1x8x32xbf16, #tpu.memory_space<vmem>>, vector<1x8x32xbf16>
    %183 = vector.shape_cast %182 : vector<1x8x32xbf16> to vector<8x32xbf16>
    %184 = vector.shape_cast %181 : vector<8x32xbf16> to vector<1x8x32xbf16>
    tpu.vector_store %arg13[%c0_69, %c0_70, %c0_71], %184 {strides = array<i32>} : memref<1x8x32xbf16, #tpu.memory_space<vmem>>, vector<1x8x32xbf16>,
    return
  }
  func.func @transform_0(%arg0: i32) -> (i32, i32, i32) {
    %c0_i32 = arith.constant 0 : i32
    %c0_i32_0 = arith.constant 0 : i32
    %c0_i32_1 = arith.constant 0 : i32
    return %arg0, %c0_i32, %c0_i32_0 : i32, i32, i32
  }
  func.func @transform_1(%arg0: i32) -> (i32, i32) {
    %c0_i32 = arith.constant 0 : i32
    %c0_i32_0 = arith.constant 0 : i32
    %c0_i32_1 = arith.constant 0 : i32
    return %c0_i32, %c0_i32_0 : i32, i32
  }
  func.func @transform_2(%arg0: i32) -> (i32, i32) {
    %c0_i32 = arith.constant 0 : i32
    %c0_i32_0 = arith.constant 0 : i32
    %c0_i32_1 = arith.constant 0 : i32
    return %c0_i32, %c0_i32_0 : i32, i32
  }
  func.func @transform_3(%arg0: i32) -> (i32, i32) {
    %c0_i32 = arith.constant 0 : i32
    %c0_i32_0 = arith.constant 0 : i32
    %c0_i32_1 = arith.constant 0 : i32
    return %c0_i32, %c0_i32_0 : i32, i32
  }
  func.func @transform_4(%arg0: i32) -> (i32, i32) {
    %c0_i32 = arith.constant 0 : i32
    %c0_i32_0 = arith.constant 0 : i32
    %c0_i32_1 = arith.constant 0 : i32
    return %c0_i32, %c0_i32_0 : i32, i32
  }
  func.func @transform_5(%arg0: i32) -> (i32, i32) {
    %c0_i32 = arith.constant 0 : i32
    %c0_i32_0 = arith.constant 0 : i32
    %c0_i32_1 = arith.constant 0 : i32
    return %c0_i32, %c0_i32_0 : i32, i32
  }
  func.func @transform_6(%arg0: i32) -> (i32, i32) {
    %c0_i32 = arith.constant 0 : i32
    %c0_i32_0 = arith.constant 0 : i32
    %c0_i32_1 = arith.constant 0 : i32
    return %c0_i32, %c0_i32_0 : i32, i32
  }
  func.func @transform_7(%arg0: i32) -> (i32, i32) {
    %c0_i32 = arith.constant 0 : i32
    %c0_i32_0 = arith.constant 0 : i32
    %c0_i32_1 = arith.constant 0 : i32
    return %c0_i32, %c0_i32_0 : i32, i32
  }
  func.func @transform_8(%arg0: i32) -> (i32, i32) {
    %c0_i32 = arith.constant 0 : i32
    %c0_i32_0 = arith.constant 0 : i32
    %c0_i32_1 = arith.constant 0 : i32
    return %c0_i32, %c0_i32_0 : i32, i32
  }
  func.func @transform_9(%arg0: i32) -> (i32, i32) {
    %c0_i32 = arith.constant 0 : i32
    %c0_i32_0 = arith.constant 0 : i32
    %c0_i32_1 = arith.constant 0 : i32
    return %c0_i32, %c0_i32_0 : i32, i32
  }
  func.func @transform_10(%arg0: i32) -> (i32, i32) {
    %c0_i32 = arith.constant 0 : i32
    %c0_i32_0 = arith.constant 0 : i32
    %c0_i32_1 = arith.constant 0 : i32
    return %c0_i32, %c0_i32_0 : i32, i32
  }
  func.func @transform_11(%arg0: i32) -> (i32, i32) {
    %c0_i32 = arith.constant 0 : i32
    %c0_i32_0 = arith.constant 0 : i32
    %c0_i32_1 = arith.constant 0 : i32
    return %c0_i32, %c0_i32_0 : i32, i32
  }
  func.func @transform_12(%arg0: i32) -> (i32, i32, i32) {
    %c0_i32 = arith.constant 0 : i32
    %c0_i32_0 = arith.constant 0 : i32
    %c0_i32_1 = arith.constant 0 : i32
    return %arg0, %c0_i32, %c0_i32_0 : i32, i32, i32
  }
}

</mosaic_0001>

<llo_original>
// kernel: tpu_custom_call.1
$region0: #{tpu_custom_call.1}
  #allocation0 [shape = 'u32[]', space=smem, size = 0x4, offset = 0x4, fixed_abs, tag = 'smem constant byte address 0x4 - core index']
  #allocation1 [shape = 'u32[72,128]{1,0:T(1,128)}', space=vmem, size = 0x9000, scoped, tag = 'internal scratch']
  #allocation2 [shape = 'bf16[8,32]{1,0:T(8,128)(2,1)}', space=vmem, size = 0x800, scoped, tag = 'scratch operand']
  %s0 = inlined_call_operand.vmem [shape: bf16[2,8,32], index: 0, kind: input, shape index: {}]
  %s1 = inlined_call_operand.vmem [shape: f32[1,32], index: 1, kind: input, shape index: {}]
  %s2 = inlined_call_operand.vmem [shape: f32[1,32], index: 2, kind: input, shape index: {}]
  %s3 = inlined_call_operand.vmem [shape: bf16[32,96], index: 3, kind: input, shape index: {}]
  %s4 = inlined_call_operand.vmem [shape: bf16[32,32], index: 4, kind: input, shape index: {}]
  %s5 = inlined_call_operand.vmem [shape: f32[1,32], index: 5, kind: input, shape index: {}]
  %s6 = inlined_call_operand.vmem [shape: f32[1,32], index: 6, kind: input, shape index: {}]
  %s7 = inlined_call_operand.vmem [shape: f32[1,32], index: 7, kind: input, shape index: {}]
  %s8 = inlined_call_operand.vmem [shape: bf16[32,128], index: 8, kind: input, shape index: {}]
  %s9 = inlined_call_operand.vmem [shape: f32[1,128], index: 9, kind: input, shape index: {}]
  %s10 = inlined_call_operand.vmem [shape: bf16[128,32], index: 10, kind: input, shape index: {}]
  %s11 = inlined_call_operand.vmem [shape: f32[1,32], index: 11, kind: input, shape index: {}]
  %s12 = inlined_call_operand.hbm [shape: bf16[2,8,32], index: 12, kind: output, shape index: {}]
  %s13 = sld [smem:[#allocation0]]
  $region81: #{tpu_custom_call.1} parent=0
    _
  %s15 = ssub.s32 1, %s13
  %s16 = scalar_select 0, %s15, %s13
  $region1: #{tpu_custom_call.1} parent=0
    #allocation3 [shape = 'u8[4096]{0}', space=vmem, size = 0x1000, scoped, tag = 'output window, operand 0']
    #allocation4 [shape = 's32[2]{0}', space=sflag, size = 0x8, scoped, tag = 'scoped memory for tpu_custom_call.1']
    %17 = vsyncpa [#allocation4], 0
    %s18 = scalar_lea.sflag [#allocation4], 1
    %19 = vsyncpa %s18, 0
    loop: start=0, step=1, limit=4
    $region2: #{tpu_custom_call.1} parent=1 // loop_pre_header
      _
    $region3: #{tpu_custom_call.1} parent=1 // loop_header
      %s21 = sphi 0, %s25
      %p22 = scmp.ge.s32.totalorder %s21, 4
      %s31 = sphi 0, %s33
      %s34 = sphi 0, %s31
      %s35 = sphi 0, %s34
      %s51 = sphi 0, %s35
      %s55 = sphi 0, %s55
      %s57 = sphi 0, %s55
      %s58 = sphi 0, %s57
      %s72 = sphi 0, %s58
      %s76 = sphi 0, %s76
      %s78 = sphi 0, %s76
      %s79 = sphi 0, %s78
      %s93 = sphi 0, %s79
      %s97 = sphi 0, %s97
      %s99 = sphi 0, %s97
      %s100 = sphi 0, %s99
      %s114 = sphi 0, %s100
      %s118 = sphi 0, %s118
      %s120 = sphi 0, %s118
      %s121 = sphi 0, %s120
      %s135 = sphi 0, %s121
      %s139 = sphi 0, %s139
      %s141 = sphi 0, %s139
      %s142 = sphi 0, %s141
      %s156 = sphi 0, %s142
      %s160 = sphi 0, %s160
      %s162 = sphi 0, %s160
      %s163 = sphi 0, %s162
      %s177 = sphi 0, %s163
      %s181 = sphi 0, %s181
      %s183 = sphi 0, %s181
      %s184 = sphi 0, %s183
      %s198 = sphi 0, %s184
      %s202 = sphi 0, %s202
      %s204 = sphi 0, %s202
      %s205 = sphi 0, %s204
      %s219 = sphi 0, %s205
      %s223 = sphi 0, %s223
      %s225 = sphi 0, %s223
      %s226 = sphi 0, %s225
      %s240 = sphi 0, %s226
      %s244 = sphi 0, %s244
      %s246 = sphi 0, %s244
      %s247 = sphi 0, %s246
      %s261 = sphi 0, %s247
      %s265 = sphi 0, %s265
      %s267 = sphi 0, %s265
      %s268 = sphi 0, %s267
      %s282 = sphi 0, %s268
      %s288 = sphi 0, %s290
      %s291 = sphi 0, %s288
      %s292 = sphi 0, %s291
      %s308 = sphi 0, %s292
    $region4: #{tpu_custom_call.1} parent=1 // loop_header_branch
      %24 = sbr.rel (%p22) target = $region8
    $region5: #{tpu_custom_call.1} parent=1 // loop_body
      %s26 = ssub.s32 %s21, 1
      %s27 = ssub.s32 %s21, 2
      %s28 = sadd.s32 %s21, 1
      %s29 = ssub.s32 %s21, %s28
      %p30 = scmp.eq.s32.totalorder %s29, 0
      %s32 = sadd.s32 %s31, 1
      %s33 = scalar_select %p30, %s31, %s32
      %p36 = pneg %p30
      %p37 = scmp.eq.s32.totalorder %s21, 1
      %p38 = por %p36, %p37
      %p39 = scmp.ne.s32.totalorder %s31, %s34
      %p40 = scmp.eq.s32.totalorder %s21, 0
      %p41 = por %p39, %p40
      %p42 = scmp.ne.s32.totalorder %s31, %s34
      %p43 = scmp.eq.s32.totalorder %s26, 1
      %p44 = por %p42, %p43
      %p45 = scmp.ne.s32.totalorder %s34, %s35
      %p46 = scmp.eq.s32.totalorder %s26, 0
      %p47 = por %p45, %p46
      %p48 = scmp.ne.s32.totalorder %s34, %s35
      %p49 = scmp.eq.s32.totalorder %s27, 1
      %p50 = por %p48, %p49
      %p52 = scmp.ne.s32.totalorder %s35, %s51
      %p53 = scmp.eq.s32.totalorder %s27, 0
      %p54 = por %p52, %p53
      %s56 = sadd.s32 %s55, 1
      %p59 = scmp.eq.s32.totalorder %s21, 1
      %p60 = scmp.ne.s32.totalorder %s55, %s57
      %p61 = scmp.eq.s32.totalorder %s21, 0
      %p62 = por %p60, %p61
      %p63 = scmp.ne.s32.totalorder %s55, %s57
      %p64 = scmp.eq.s32.totalorder %s26, 1
      %p65 = por %p63, %p64
      %p66 = scmp.ne.s32.totalorder %s57, %s58
      %p67 = scmp.eq.s32.totalorder %s26, 0
      %p68 = por %p66, %p67
      %p69 = scmp.ne.s32.totalorder %s57, %s58
      %p70 = scmp.eq.s32.totalorder %s27, 1
      %p71 = por %p69, %p70
      %p73 = scmp.ne.s32.totalorder %s58, %s72
      %p74 = scmp.eq.s32.totalorder %s27, 0
      %p75 = por %p73, %p74
      %s77 = sadd.s32 %s76, 1
      %p80 = scmp.eq.s32.totalorder %s21, 1
      %p81 = scmp.ne.s32.totalorder %s76, %s78
      %p82 = scmp.eq.s32.totalorder %s21, 0
      %p83 = por %p81, %p82
      %p84 = scmp.ne.s32.totalorder %s76, %s78
      %p85 = scmp.eq.s32.totalorder %s26, 1
      %p86 = por %p84, %p85
      %p87 = scmp.ne.s32.totalorder %s78, %s79
      %p88 = scmp.eq.s32.totalorder %s26, 0
      %p89 = por %p87, %p88
      %p90 = scmp.ne.s32.totalorder %s78, %s79
      %p91 = scmp.eq.s32.totalorder %s27, 1
      %p92 = por %p90, %p91
      %p94 = scmp.ne.s32.totalorder %s79, %s93
      %p95 = scmp.eq.s32.totalorder %s27, 0
      %p96 = por %p94, %p95
      %s98 = sadd.s32 %s97, 1
      %p101 = scmp.eq.s32.totalorder %s21, 1
      %p102 = scmp.ne.s32.totalorder %s97, %s99
      %p103 = scmp.eq.s32.totalorder %s21, 0
      %p104 = por %p102, %p103
      %p105 = scmp.ne.s32.totalorder %s97, %s99
      %p106 = scmp.eq.s32.totalorder %s26, 1
      %p107 = por %p105, %p106
      %p108 = scmp.ne.s32.totalorder %s99, %s100
      %p109 = scmp.eq.s32.totalorder %s26, 0
      %p110 = por %p108, %p109
      %p111 = scmp.ne.s32.totalorder %s99, %s100
      %p112 = scmp.eq.s32.totalorder %s27, 1
      %p113 = por %p111, %p112
      %p115 = scmp.ne.s32.totalorder %s100, %s114
      %p116 = scmp.eq.s32.totalorder %s27, 0
      %p117 = por %p115, %p116
      %s119 = sadd.s32 %s118, 1
      %p122 = scmp.eq.s32.totalorder %s21, 1
      %p123 = scmp.ne.s32.totalorder %s118, %s120
      %p124 = scmp.eq.s32.totalorder %s21, 0
      %p125 = por %p123, %p124
      %p126 = scmp.ne.s32.totalorder %s118, %s120
      %p127 = scmp.eq.s32.totalorder %s26, 1
      %p128 = por %p126, %p127
      %p129 = scmp.ne.s32.totalorder %s120, %s121
      %p130 = scmp.eq.s32.totalorder %s26, 0
      %p131 = por %p129, %p130
      %p132 = scmp.ne.s32.totalorder %s120, %s121
      %p133 = scmp.eq.s32.totalorder %s27, 1
      %p134 = por %p132, %p133
      %p136 = scmp.ne.s32.totalorder %s121, %s135
      %p137 = scmp.eq.s32.totalorder %s27, 0
      %p138 = por %p136, %p137
      %s140 = sadd.s32 %s139, 1
      %p143 = scmp.eq.s32.totalorder %s21, 1
      %p144 = scmp.ne.s32.totalorder %s139, %s141
      %p145 = scmp.eq.s32.totalorder %s21, 0
      %p146 = por %p144, %p145
      %p147 = scmp.ne.s32.totalorder %s139, %s141
      %p148 = scmp.eq.s32.totalorder %s26, 1
      %p149 = por %p147, %p148
      %p150 = scmp.ne.s32.totalorder %s141, %s142
      %p151 = scmp.eq.s32.totalorder %s26, 0
      %p152 = por %p150, %p151
      %p153 = scmp.ne.s32.totalorder %s141, %s142
      %p154 = scmp.eq.s32.totalorder %s27, 1
      %p155 = por %p153, %p154
      %p157 = scmp.ne.s32.totalorder %s142, %s156
      %p158 = scmp.eq.s32.totalorder %s27, 0
      %p159 = por %p157, %p158
      %s161 = sadd.s32 %s160, 1
      %p164 = scmp.eq.s32.totalorder %s21, 1
      %p165 = scmp.ne.s32.totalorder %s160, %s162
      %p166 = scmp.eq.s32.totalorder %s21, 0
      %p167 = por %p165, %p166
      %p168 = scmp.ne.s32.totalorder %s160, %s162
      %p169 = scmp.eq.s32.totalorder %s26, 1
      %p170 = por %p168, %p169
      %p171 = scmp.ne.s32.totalorder %s162, %s163
      %p172 = scmp.eq.s32.totalorder %s26, 0
      %p173 = por %p171, %p172
      %p174 = scmp.ne.s32.totalorder %s162, %s163
      %p175 = scmp.eq.s32.totalorder %s27, 1
      %p176 = por %p174, %p175
      %p178 = scmp.ne.s32.totalorder %s163, %s177
      %p179 = scmp.eq.s32.totalorder %s27, 0
      %p180 = por %p178, %p179
      %s182 = sadd.s32 %s181, 1
      %p185 = scmp.eq.s32.totalorder %s21, 1
      %p186 = scmp.ne.s32.totalorder %s181, %s183
      %p187 = scmp.eq.s32.totalorder %s21, 0
      %p188 = por %p186, %p187
      %p189 = scmp.ne.s32.totalorder %s181, %s183
      %p190 = scmp.eq.s32.totalorder %s26, 1
      %p191 = por %p189, %p190
      %p192 = scmp.ne.s32.totalorder %s183, %s184
      %p193 = scmp.eq.s32.totalorder %s26, 0
      %p194 = por %p192, %p193
      %p195 = scmp.ne.s32.totalorder %s183, %s184
      %p196 = scmp.eq.s32.totalorder %s27, 1
      %p197 = por %p195, %p196
      %p199 = scmp.ne.s32.totalorder %s184, %s198
      %p200 = scmp.eq.s32.totalorder %s27, 0
      %p201 = por %p199, %p200
      %s203 = sadd.s32 %s202, 1
      %p206 = scmp.eq.s32.totalorder %s21, 1
      %p207 = scmp.ne.s32.totalorder %s202, %s204
      %p208 = scmp.eq.s32.totalorder %s21, 0
      %p209 = por %p207, %p208
      %p210 = scmp.ne.s32.totalorder %s202, %s204
      %p211 = scmp.eq.s32.totalorder %s26, 1
      %p212 = por %p210, %p211
      %p213 = scmp.ne.s32.totalorder %s204, %s205
      %p214 = scmp.eq.s32.totalorder %s26, 0
      %p215 = por %p213, %p214
      %p216 = scmp.ne.s32.totalorder %s204, %s205
      %p217 = scmp.eq.s32.totalorder %s27, 1
      %p218 = por %p216, %p217
      %p220 = scmp.ne.s32.totalorder %s205, %s219
      %p221 = scmp.eq.s32.totalorder %s27, 0
      %p222 = por %p220, %p221
      %s224 = sadd.s32 %s223, 1
      %p227 = scmp.eq.s32.totalorder %s21, 1
      %p228 = scmp.ne.s32.totalorder %s223, %s225
      %p229 = scmp.eq.s32.totalorder %s21, 0
      %p230 = por %p228, %p229
      %p231 = scmp.ne.s32.totalorder %s223, %s225
      %p232 = scmp.eq.s32.totalorder %s26, 1
      %p233 = por %p231, %p232
      %p234 = scmp.ne.s32.totalorder %s225, %s226
      %p235 = scmp.eq.s32.totalorder %s26, 0
      %p236 = por %p234, %p235
      %p237 = scmp.ne.s32.totalorder %s225, %s226
      %p238 = scmp.eq.s32.totalorder %s27, 1
      %p239 = por %p237, %p238
      %p241 = scmp.ne.s32.totalorder %s226, %s240
      %p242 = scmp.eq.s32.totalorder %s27, 0
      %p243 = por %p241, %p242
      %s245 = sadd.s32 %s244, 1
      %p248 = scmp.eq.s32.totalorder %s21, 1
      %p249 = scmp.ne.s32.totalorder %s244, %s246
      %p250 = scmp.eq.s32.totalorder %s21, 0
      %p251 = por %p249, %p250
      %p252 = scmp.ne.s32.totalorder %s244, %s246
      %p253 = scmp.eq.s32.totalorder %s26, 1
      %p254 = por %p252, %p253
      %p255 = scmp.ne.s32.totalorder %s246, %s247
      %p256 = scmp.eq.s32.totalorder %s26, 0
      %p257 = por %p255, %p256
      %p258 = scmp.ne.s32.totalorder %s246, %s247
      %p259 = scmp.eq.s32.totalorder %s27, 1
      %p260 = por %p258, %p259
      %p262 = scmp.ne.s32.totalorder %s247, %s261
      %p263 = scmp.eq.s32.totalorder %s27, 0
      %p264 = por %p262, %p263
      %s266 = sadd.s32 %s265, 1
      %p269 = scmp.eq.s32.totalorder %s21, 1
      %p270 = scmp.ne.s32.totalorder %s265, %s267
      %p271 = scmp.eq.s32.totalorder %s21, 0
      %p272 = por %p270, %p271
      %p273 = scmp.ne.s32.totalorder %s265, %s267
      %p274 = scmp.eq.s32.totalorder %s26, 1
      %p275 = por %p273, %p274
      %p276 = scmp.ne.s32.totalorder %s267, %s268
      %p277 = scmp.eq.s32.totalorder %s26, 0
      %p278 = por %p276, %p277
      %p279 = scmp.ne.s32.totalorder %s267, %s268
      %p280 = scmp.eq.s32.totalorder %s27, 1
      %p281 = por %p279, %p280
      %p283 = scmp.ne.s32.totalorder %s268, %s282
      %p284 = scmp.eq.s32.totalorder %s27, 0
      %p285 = por %p283, %p284
      %s286 = ssub.s32 %s21, %s28
      %p287 = scmp.eq.s32.totalorder %s286, 0
      %s289 = sadd.s32 %s288, 1
      %s290 = scalar_select %p287, %s288, %s289
      %p293 = pneg %p287
      %p294 = scmp.eq.s32.totalorder %s21, 1
      %p295 = por %p293, %p294
      %p296 = scmp.ne.s32.totalorder %s288, %s291
      %p297 = scmp.eq.s32.totalorder %s21, 0
      %p298 = por %p296, %p297
      %p299 = scmp.ne.s32.totalorder %s288, %s291
      %p300 = scmp.eq.s32.totalorder %s26, 1
      %p301 = por %p299, %p300
      %p302 = scmp.ne.s32.totalorder %s291, %s292
      %p303 = scmp.eq.s32.totalorder %s26, 0
      %p304 = por %p302, %p303
      %p305 = scmp.ne.s32.totalorder %s291, %s292
      %p306 = scmp.eq.s32.totalorder %s27, 1
      %p307 = por %p305, %p306
      %p309 = scmp.ne.s32.totalorder %s292, %s308
      %p310 = scmp.eq.s32.totalorder %s27, 0
      %p311 = por %p309, %p310
      %p312 = scmp.le.s32.totalorder 1, %s21
      %p313 = scmp.lt.s32.totalorder %s21, 3
      %p314 = pnand %p312, %p313
      %p315 = pneg %p314
      // Predicated region
      $region9: #{tpu_custom_call.1} parent=5 // pred_check
        _
      $region10: #{tpu_custom_call.1} parent=5 // pred_check_branch
        %317 = sbr.rel (%p314) target = $region12
      $region11: #{tpu_custom_call.1} parent=5 // pred_region
        %s318 = ssub.s32 %s21, 1
        // Predicated region
        $region13: #{tpu_custom_call.1} parent=11 // pred_check
          %p319 = pneg %p68
        $region14: #{tpu_custom_call.1} parent=11 // pred_check_branch
          %321 = sbr.rel (%p319) target = $region16
        $region15: #{tpu_custom_call.1} parent=11 // pred_region
          _
        $region16: #{tpu_custom_call.1} parent=11 // pred_fallthru
          _
        // Predicated region
        $region17: #{tpu_custom_call.1} parent=11 // pred_check
          %p322 = pneg %p89
        $region18: #{tpu_custom_call.1} parent=11 // pred_check_branch
          %324 = sbr.rel (%p322) target = $region20
        $region19: #{tpu_custom_call.1} parent=11 // pred_region
          _
        $region20: #{tpu_custom_call.1} parent=11 // pred_fallthru
          _
        // Predicated region
        $region21: #{tpu_custom_call.1} parent=11 // pred_check
          %p325 = pneg %p110
        $region22: #{tpu_custom_call.1} parent=11 // pred_check_branch
          %327 = sbr.rel (%p325) target = $region24
        $region23: #{tpu_custom_call.1} parent=11 // pred_region
          _
        $region24: #{tpu_custom_call.1} parent=11 // pred_fallthru
          _
        // Predicated region
        $region25: #{tpu_custom_call.1} parent=11 // pred_check
          %p328 = pneg %p131
        $region26: #{tpu_custom_call.1} parent=11 // pred_check_branch
          %330 = sbr.rel (%p328) target = $region28
        $region27: #{tpu_custom_call.1} parent=11 // pred_region
          _
        $region28: #{tpu_custom_call.1} parent=11 // pred_fallthru
          _
        // Predicated region
        $region29: #{tpu_custom_call.1} parent=11 // pred_check
          %p331 = pneg %p152
        $region30: #{tpu_custom_call.1} parent=11 // pred_check_branch
          %333 = sbr.rel (%p331) target = $region32
        $region31: #{tpu_custom_call.1} parent=11 // pred_region
          _
        $region32: #{tpu_custom_call.1} parent=11 // pred_fallthru
          _
        // Predicated region
        $region33: #{tpu_custom_call.1} parent=11 // pred_check
          %p334 = pneg %p173
        $region34: #{tpu_custom_call.1} parent=11 // pred_check_branch
          %336 = sbr.rel (%p334) target = $region36
        $region35: #{tpu_custom_call.1} parent=11 // pred_region
          _
        $region36: #{tpu_custom_call.1} parent=11 // pred_fallthru
          _
        // Predicated region
        $region37: #{tpu_custom_call.1} parent=11 // pred_check
          %p337 = pneg %p194
        $region38: #{tpu_custom_call.1} parent=11 // pred_check_branch
          %339 = sbr.rel (%p337) target = $region40
        $region39: #{tpu_custom_call.1} parent=11 // pred_region
          _
        $region40: #{tpu_custom_call.1} parent=11 // pred_fallthru
          _
        // Predicated region
        $region41: #{tpu_custom_call.1} parent=11 // pred_check
          %p340 = pneg %p215
        $region42: #{tpu_custom_call.1} parent=11 // pred_check_branch
          %342 = sbr.rel (%p340) target = $region44
        $region43: #{tpu_custom_call.1} parent=11 // pred_region
          _
        $region44: #{tpu_custom_call.1} parent=11 // pred_fallthru
          _
        // Predicated region
        $region45: #{tpu_custom_call.1} parent=11 // pred_check
          %p343 = pneg %p236
        $region46: #{tpu_custom_call.1} parent=11 // pred_check_branch
          %345 = sbr.rel (%p343) target = $region48
        $region47: #{tpu_custom_call.1} parent=11 // pred_region
          _
        $region48: #{tpu_custom_call.1} parent=11 // pred_fallthru
          _
        // Predicated region
        $region49: #{tpu_custom_call.1} parent=11 // pred_check
          %p346 = pneg %p257
        $region50: #{tpu_custom_call.1} parent=11 // pred_check_branch
          %348 = sbr.rel (%p346) target = $region52
        $region51: #{tpu_custom_call.1} parent=11 // pred_region
          _
        $region52: #{tpu_custom_call.1} parent=11 // pred_fallthru
          _
        // Predicated region
        $region53: #{tpu_custom_call.1} parent=11 // pred_check
          %p349 = pneg %p278
        $region54: #{tpu_custom_call.1} parent=11 // pred_check_branch
          %351 = sbr.rel (%p349) target = $region56
        $region55: #{tpu_custom_call.1} parent=11 // pred_region
          _
        $region56: #{tpu_custom_call.1} parent=11 // pred_fallthru
          _
      $region12: #{tpu_custom_call.1} parent=5 // pred_fallthru
        _
      %p352 = scmp.lt.s32.totalorder %s21, 2
      // Predicated region
      $region57: #{tpu_custom_call.1} parent=5 // pred_check
        %p353 = pneg %p352
      $region58: #{tpu_custom_call.1} parent=5 // pred_check_branch
        %355 = sbr.rel (%p353) target = $region60
      $region59: #{tpu_custom_call.1} parent=5 // pred_region
        // Predicated region
        $region61: #{tpu_custom_call.1} parent=59 // pred_check
          %p356 = pneg %p41
        $region62: #{tpu_custom_call.1} parent=59 // pred_check_branch
          %358 = sbr.rel (%p356) target = $region64
        $region63: #{tpu_custom_call.1} parent=59 // pred_region
          %p359 = scmp.lt.s32.totalorder %s21, 1
          %s360 = scalar_select %p359, %s21, 1
          %s361 = smul.addr %s360, 4
          %s362 = scalar_lea.vmem %s0, %s361
        $region64: #{tpu_custom_call.1} parent=59 // pred_fallthru
          _
      $region60: #{tpu_custom_call.1} parent=5 // pred_fallthru
        _
      %p363 = scmp.le.s32.totalorder 1, %s21
      %p364 = scmp.lt.s32.totalorder %s21, 3
      %p365 = pnand %p363, %p364
      %p366 = pneg %p365
      // Predicated region
      $region65: #{tpu_custom_call.1} parent=5 // pred_check
        _
      $region66: #{tpu_custom_call.1} parent=5 // pred_check_branch
        %368 = sbr.rel (%p365) target = $region68
      $region67: #{tpu_custom_call.1} parent=5 // pred_region
        %s369 = ssub.s32 %s21, 1
        %p370 = scmp.lt.s32.totalorder %s26, 1
        %s371 = scalar_select %p370, %s26, 1
        %s372 = smul.addr %s371, 4
        %s373 = scalar_lea.vmem %s0, %s372
        %p374 = pneg %p47
        %p375 = pneg %p44
        %p376 = pneg %p68
        %p377 = pneg %p65
        %p378 = pneg %p89
        %p379 = pneg %p86
        %p380 = pneg %p110
        %p381 = pneg %p107
        %p382 = pneg %p131
        %p383 = pneg %p128
        %p384 = pneg %p152
        %p385 = pneg %p149
        %p386 = pneg %p173
        %p387 = pneg %p170
        %p388 = pneg %p194
        %p389 = pneg %p191
        %p390 = pneg %p215
        %p391 = pneg %p212
        %p392 = pneg %p236
        %p393 = pneg %p233
        %p394 = pneg %p257
        %p395 = pneg %p254
        %p396 = pneg %p278
        %p397 = pneg %p275
        %p398 = pneg %p304
        %p399 = pneg %p301
        %s400 = sand.u32 %s291, 1
        %s401 = scalar_lea.sflag [#allocation4], %s400
        %s402 = sand.u32 %s291, 1
        %s403 = smul.addr %s402, 4
        %s404 = scalar_lea.vmem [#allocation3], %s403
        %p405 = scmp.lt.s32.totalorder %s26, 1
        %s406 = scalar_select %p405, %s26, 1
        %s407 = smul.addr %s406, 4
        %s408 = scalar_lea.vmem %s0, %s407
        %v410 = vld [vmem:[%s408] sm:$0xf]
        %v411 = vunpack.c.l.bf16 %v410
        %v412 = vld [vmem:[%s1] sm:$0x1]
        %v413 = vld [vmem:[%s2] sm:$0x1]
        %vm414 = vcmask 261120
        %v415 = vsel %vm414, %v411, 0.0
        %416 = vadd.xlane.f32.xlu0 %v415
        %v417 = vpop.xlane.xlu0 %416
        %v418 = vrcp.pop 32.0
        %v419 = vmul.f32 32.0, %v418
        %v420 = vsub.f32 1.0, %v419
        %v421 = vmul.f32 %v418, %v420
        %v422 = vadd.f32 %v418, %v421
        %vm423 = vweird.f32 %v418
        %v424 = vsel %vm423, %v418, %v422
        %v425 = vmul.f32 %v417, %v424
        %v426 = vsub.f32 %v411, %v425
        %v427 = vmul.f32 %v426, %v426
        %v428 = vsel %vm414, %v427, 0.0
        %429 = vadd.xlane.f32.xlu0 %v428
        %v430 = vpop.xlane.xlu0 %429
        %v431 = vmul.f32 %v430, %v424
        %v432 = vadd.f32 %v431, 1e-05
        %v433 = vrsqrt.pop %v432
        %v434 = vmul.f32 %v433, %v432
        %v435 = vmul.f32 %v434, %v433
        %v436 = vmul.f32 0.5, %v435
        %v437 = vsub.f32 1.5, %v436
        %v438 = vmul.f32 %v433, %v437
        %vm439 = vweird.f32 %v432
        %vm440 = vweird.f32 %v433
        %vm441 = vmor %vm439, %vm440
        %v442 = vsel %vm441, %v433, %v438
        %v443 = vmul.f32 %v426, %v442
        %v445 = vperm.slane %v412, 0
        %v447 = vmul.f32 %v443, %v445
        %v449 = vperm.slane %v413, 0
        %v451 = vadd.f32 %v447, %v449
        %v452 = vpack.c.bf16 %v451, %v451
        %v453 = vld [vmem:[%s3] sm:$0xf]
        %v454 = vld [vmem:[%s3 + $0x4] sm:$0xf]
        %v455 = vld [vmem:[%s3 + $0x8] sm:$0xf]
        %v456 = vld [vmem:[%s3 + $0xc] sm:$0xf]
        %v461 = vunpack.c.l.b16 %v453
        %v462 = vunpack.c.l.b16 %v454
        %v463 = vunpack.c.l.b16 %v455
        %v464 = vunpack.c.l.b16 %v456
        %v465 = vpack.c.b16 %v462, %v461
        %v466 = vpack.c.b16 %v464, %v463
        %v470 = vsel %vm414, %v452, 0
        %472 = vmatpush.bf16.msra.mxu0 0
        %473 = vmatpush.bf16.msra.mxu0 0
        %474 = vmatpush.bf16.msra.mxu0 0
        %475 = vmatpush.bf16.msra.mxu0 0
        %476 = vmatpush.bf16.msra.mxu0 0
        %477 = vmatpush.bf16.msra.mxu0 0
        %478 = vmatpush.bf16.msra.mxu0 %v466
        %479 = vmatpush.bf16.msra.mxu0 %v465
        %480 = vmatmul.bf16.gmra.mxu0 %v470
        %v481 = vpop.f32.mrf.mxu0
        %v482 = vadd.f32 0.0, %v481
        %v483 = vpop.f32.mrf.mxu0
        %484 = vdwg.mxu0
        %v485 = vmul.f32 %v482, 0.35355338
        %v486 = vlaneseq
        %v487 = vshrl.u32 %v486, 7
        %v488 = vlaneseq
        %v489 = vand.u32 %v488, 127
        %vm490 = vcmp.le.s32.totalorder %v489, %v487
        %v491 = vpack.c.bf16 %v485, %v485
        %v492 = vpack.c.bf16 %v482, %v482
        %494 = vrot.lane.b32.xlu0 %v492, 96
        %v495 = vpop.permute.xlu0 %494
        %vm496 = vcmask 64512
        %v498 = vsel %vm496, %v491, 0
        %v501 = vsel %vm496, %v495, 0
        %503 = vmatpush.bf16.xpose.msra.mxu0 0
        %504 = vmatpush.bf16.xpose.msra.mxu0 0
        %505 = vmatpush.bf16.xpose.msra.mxu0 0
        %506 = vmatpush.bf16.xpose.msra.mxu0 0
        %507 = vmatpush.bf16.xpose.msra.mxu0 0
        %508 = vmatpush.bf16.xpose.msra.mxu0 0
        %509 = vmatpush.bf16.xpose.msra.mxu0 0
        %510 = vmatpush.bf16.xpose.msra.mxu0 %v501
        %511 = vmatmul.bf16.gmra.mxu0 %v498
        %v512 = vpop.f32.mrf.mxu0
        %v513 = vadd.f32 0.0, %v512
        %v514 = vpop.f32.mrf.mxu0
        %515 = vdwg.mxu0
        %v516 = vsel %vm490, %v513, -1e+30
        %v517 = vsel %vm496, %v516, -inf
        %518 = vmax.xlane.f32.xlu0 %v517
        %v519 = vpop.xlane.xlu0 %518
        %v520 = vsub.f32 %v516, %v519
        %v521 = vmul.f32 %v520, 1.442695
        %v522 = vpow.pop %v521
        %v523 = vsel %vm496, %v522, 0.0
        %524 = vadd.xlane.f32.xlu0 %v523
        %v525 = vpop.xlane.xlu0 %524
        %v526 = vrcp.pop %v525
        %v527 = vmul.f32 %v525, %v526
        %v528 = vsub.f32 1.0, %v527
        %v529 = vmul.f32 %v526, %v528
        %v530 = vadd.f32 %v526, %v529
        %vm531 = vweird.f32 %v525
        %vm532 = vweird.f32 %v526
        %vm533 = vmor %vm531, %vm532
        %v534 = vsel %vm533, %v526, %v530
        %v535 = vand.u32 2147483647, %v525
        %vm536 = vcmp.eq.f32.partialorder %v535, 8.507059e+37
        %v537 = vand.u32 %v525, 2147483648
        %v538 = vor.u32 1.1754944e-38, %v537
        %v539 = vsel %vm536, %v538, %v534
        %v540 = vmul.f32 %v522, %v539
        %v541 = vpack.c.bf16 %v540, %v540
        %542 = vrot.lane.b32.xlu0 %v492, 64
        %v543 = vpop.permute.xlu0 %542
        %v545 = vsel %vm496, %v541, 0
        %vm547 = vcmask 1043456
        %v549 = vsel %vm547, %v543, 0
        %551 = vmatpush.bf16.msra.mxu0 0
        %552 = vmatpush.bf16.msra.mxu0 0
        %553 = vmatpush.bf16.msra.mxu0 0
        %554 = vmatpush.bf16.msra.mxu0 0
        %555 = vmatpush.bf16.msra.mxu0 0
        %556 = vmatpush.bf16.msra.mxu0 0
        %557 = vmatpush.bf16.msra.mxu0 0
        %558 = vmatpush.bf16.msra.mxu0 %v549
        %559 = vmatmul.bf16.gmra.mxu0 %v545
        %v560 = vpop.f32.mrf.mxu0
        %v561 = vadd.f32 0.0, %v560
        %v562 = vpop.f32.mrf.mxu0
        %563 = vdwg.mxu0
        %v564 = vpack.c.bf16 %v561, %v561
        %vm565 = vcmask 60416
        %566 = vst.msk [vmem:[#allocation2] sm:$0xf] %vm565, %v564
        %568 = vrot.lane.b32.xlu0 %v491, 120
        %v569 = vpop.permute.xlu0 %568
        %570 = vrot.lane.b32.xlu0 %v492, 88
        %v571 = vpop.permute.xlu0 %570
        %v573 = vsel %vm496, %v569, 0
        %v576 = vsel %vm496, %v571, 0
        %578 = vmatpush.bf16.xpose.msra.mxu0 0
        %579 = vmatpush.bf16.xpose.msra.mxu0 0
        %580 = vmatpush.bf16.xpose.msra.mxu0 0
        %581 = vmatpush.bf16.xpose.msra.mxu0 0
        %582 = vmatpush.bf16.xpose.msra.mxu0 0
        %583 = vmatpush.bf16.xpose.msra.mxu0 0
        %584 = vmatpush.bf16.xpose.msra.mxu0 0
        %585 = vmatpush.bf16.xpose.msra.mxu0 %v576
        %586 = vmatmul.bf16.gmra.mxu0 %v573
        %v587 = vpop.f32.mrf.mxu0
        %v588 = vadd.f32 0.0, %v587
        %v589 = vpop.f32.mrf.mxu0
        %590 = vdwg.mxu0
        %v591 = vsel %vm490, %v588, -1e+30
        %v592 = vsel %vm496, %v591, -inf
        %593 = vmax.xlane.f32.xlu0 %v592
        %v594 = vpop.xlane.xlu0 %593
        %v595 = vsub.f32 %v591, %v594
        %v596 = vmul.f32 %v595, 1.442695
        %v597 = vpow.pop %v596
        %v598 = vsel %vm496, %v597, 0.0
        %599 = vadd.xlane.f32.xlu0 %v598
        %v600 = vpop.xlane.xlu0 %599
        %v601 = vrcp.pop %v600
        %v602 = vmul.f32 %v600, %v601
        %v603 = vsub.f32 1.0, %v602
        %v604 = vmul.f32 %v601, %v603
        %v605 = vadd.f32 %v601, %v604
        %vm606 = vweird.f32 %v600
        %vm607 = vweird.f32 %v601
        %vm608 = vmor %vm606, %vm607
        %v609 = vsel %vm608, %v601, %v605
        %v610 = vand.u32 2147483647, %v600
        %vm611 = vcmp.eq.f32.partialorder %v610, 8.507059e+37
        %v612 = vand.u32 %v600, 2147483648
        %v613 = vor.u32 1.1754944e-38, %v612
        %v614 = vsel %vm611, %v613, %v609
        %v615 = vmul.f32 %v597, %v614
        %v616 = vpack.c.bf16 %v615, %v615
        %617 = vrot.lane.b32.xlu0 %v492, 56
        %v618 = vpop.permute.xlu0 %617
        %v620 = vsel %vm496, %v616, 0
        %v623 = vsel %vm547, %v618, 0
        %625 = vmatpush.bf16.msra.mxu0 0
        %626 = vmatpush.bf16.msra.mxu0 0
        %627 = vmatpush.bf16.msra.mxu0 0
        %628 = vmatpush.bf16.msra.mxu0 0
        %629 = vmatpush.bf16.msra.mxu0 0
        %630 = vmatpush.bf16.msra.mxu0 0
        %631 = vmatpush.bf16.msra.mxu0 0
        %632 = vmatpush.bf16.msra.mxu0 %v623
        %633 = vmatmul.bf16.gmra.mxu0 %v620
        %v634 = vpop.f32.mrf.mxu0
        %v635 = vadd.f32 0.0, %v634
        %v636 = vpop.f32.mrf.mxu0
        %637 = vdwg.mxu0
        %v638 = vpack.c.bf16 %v635, %v635
        %640 = vrot.lane.b32.xlu0 %v638, 8
        %v641 = vpop.permute.xlu0 %640
        %vm643 = vcmask 126016
        %644 = vst.msk [vmem:[#allocation2] sm:$0xf] %vm643, %v641
        %645 = vrot.lane.b32.xlu0 %v491, 112
        %v646 = vpop.permute.xlu0 %645
        %647 = vrot.lane.b32.xlu0 %v492, 80
        %v648 = vpop.permute.xlu0 %647
        %v650 = vsel %vm496, %v646, 0
        %v653 = vsel %vm496, %v648, 0
        %655 = vmatpush.bf16.xpose.msra.mxu0 0
        %656 = vmatpush.bf16.xpose.msra.mxu0 0
        %657 = vmatpush.bf16.xpose.msra.mxu0 0
        %658 = vmatpush.bf16.xpose.msra.mxu0 0
        %659 = vmatpush.bf16.xpose.msra.mxu0 0
        %660 = vmatpush.bf16.xpose.msra.mxu0 0
        %661 = vmatpush.bf16.xpose.msra.mxu0 0
        %662 = vmatpush.bf16.xpose.msra.mxu0 %v653
        %663 = vmatmul.bf16.gmra.mxu0 %v650
        %v664 = vpop.f32.mrf.mxu0
        %v665 = vadd.f32 0.0, %v664
        %v666 = vpop.f32.mrf.mxu0
        %667 = vdwg.mxu0
        %v668 = vsel %vm490, %v665, -1e+30
        %v669 = vsel %vm496, %v668, -inf
        %670 = vmax.xlane.f32.xlu0 %v669
        %v671 = vpop.xlane.xlu0 %670
        %v672 = vsub.f32 %v668, %v671
        %v673 = vmul.f32 %v672, 1.442695
        %v674 = vpow.pop %v673
        %v675 = vsel %vm496, %v674, 0.0
        %676 = vadd.xlane.f32.xlu0 %v675
        %v677 = vpop.xlane.xlu0 %676
        %v678 = vrcp.pop %v677
        %v679 = vmul.f32 %v677, %v678
        %v680 = vsub.f32 1.0, %v679
        %v681 = vmul.f32 %v678, %v680
        %v682 = vadd.f32 %v678, %v681
        %vm683 = vweird.f32 %v677
        %vm684 = vweird.f32 %v678
        %vm685 = vmor %vm683, %vm684
        %v686 = vsel %vm685, %v678, %v682
        %v687 = vand.u32 2147483647, %v677
        %vm688 = vcmp.eq.f32.partialorder %v687, 8.507059e+37
        %v689 = vand.u32 %v677, 2147483648
        %v690 = vor.u32 1.1754944e-38, %v689
        %v691 = vsel %vm688, %v690, %v686
        %v692 = vmul.f32 %v674, %v691
        %v693 = vpack.c.bf16 %v692, %v692
        %694 = vrot.lane.b32.xlu0 %v492, 48
        %v695 = vpop.permute.xlu0 %694
        %v697 = vsel %vm496, %v693, 0
        %v700 = vsel %vm547, %v695, 0
        %702 = vmatpush.bf16.msra.mxu0 0
        %703 = vmatpush.bf16.msra.mxu0 0
        %704 = vmatpush.bf16.msra.mxu0 0
        %705 = vmatpush.bf16.msra.mxu0 0
        %706 = vmatpush.bf16.msra.mxu0 0
        %707 = vmatpush.bf16.msra.mxu0 0
        %708 = vmatpush.bf16.msra.mxu0 0
        %709 = vmatpush.bf16.msra.mxu0 %v700
        %710 = vmatmul.bf16.gmra.mxu0 %v697
        %v711 = vpop.f32.mrf.mxu0
        %v712 = vadd.f32 0.0, %v711
        %v713 = vpop.f32.mrf.mxu0
        %714 = vdwg.mxu0
        %v715 = vpack.c.bf16 %v712, %v712
        %717 = vrot.lane.b32.xlu0 %v715, 16
        %v718 = vpop.permute.xlu0 %717
        %vm720 = vcmask 191616
        %721 = vst.msk [vmem:[#allocation2] sm:$0xf] %vm720, %v718
        %722 = vrot.lane.b32.xlu0 %v491, 104
        %v723 = vpop.permute.xlu0 %722
        %724 = vrot.lane.b32.xlu0 %v492, 72
        %v725 = vpop.permute.xlu0 %724
        %v727 = vsel %vm496, %v723, 0
        %v730 = vsel %vm496, %v725, 0
        %732 = vmatpush.bf16.xpose.msra.mxu0 0
        %733 = vmatpush.bf16.xpose.msra.mxu0 0
        %734 = vmatpush.bf16.xpose.msra.mxu0 0
        %735 = vmatpush.bf16.xpose.msra.mxu0 0
        %736 = vmatpush.bf16.xpose.msra.mxu0 0
        %737 = vmatpush.bf16.xpose.msra.mxu0 0
        %738 = vmatpush.bf16.xpose.msra.mxu0 0
        %739 = vmatpush.bf16.xpose.msra.mxu0 %v730
        %740 = vmatmul.bf16.gmra.mxu0 %v727
        %v741 = vpop.f32.mrf.mxu0
        %v742 = vadd.f32 0.0, %v741
        %v743 = vpop.f32.mrf.mxu0
        %744 = vdwg.mxu0
        %v745 = vsel %vm490, %v742, -1e+30
        %v746 = vsel %vm496, %v745, -inf
        %747 = vmax.xlane.f32.xlu0 %v746
        %v748 = vpop.xlane.xlu0 %747
        %v749 = vsub.f32 %v745, %v748
        %v750 = vmul.f32 %v749, 1.442695
        %v751 = vpow.pop %v750
        %v752 = vsel %vm496, %v751, 0.0
        %753 = vadd.xlane.f32.xlu0 %v752
        %v754 = vpop.xlane.xlu0 %753
        %v755 = vrcp.pop %v754
        %v756 = vmul.f32 %v754, %v755
        %v757 = vsub.f32 1.0, %v756
        %v758 = vmul.f32 %v755, %v757
        %v759 = vadd.f32 %v755, %v758
        %vm760 = vweird.f32 %v754
        %vm761 = vweird.f32 %v755
        %vm762 = vmor %vm760, %vm761
        %v763 = vsel %vm762, %v755, %v759
        %v764 = vand.u32 2147483647, %v754
        %vm765 = vcmp.eq.f32.partialorder %v764, 8.507059e+37
        %v766 = vand.u32 %v754, 2147483648
        %v767 = vor.u32 1.1754944e-38, %v766
        %v768 = vsel %vm765, %v767, %v763
        %v769 = vmul.f32 %v751, %v768
        %v770 = vpack.c.bf16 %v769, %v769
        %771 = vrot.lane.b32.xlu0 %v492, 40
        %v772 = vpop.permute.xlu0 %771
        %v774 = vsel %vm496, %v770, 0
        %v777 = vsel %vm547, %v772, 0
        %779 = vmatpush.bf16.msra.mxu0 0
        %780 = vmatpush.bf16.msra.mxu0 0
        %781 = vmatpush.bf16.msra.mxu0 0
        %782 = vmatpush.bf16.msra.mxu0 0
        %783 = vmatpush.bf16.msra.mxu0 0
        %784 = vmatpush.bf16.msra.mxu0 0
        %785 = vmatpush.bf16.msra.mxu0 0
        %786 = vmatpush.bf16.msra.mxu0 %v777
        %787 = vmatmul.bf16.gmra.mxu0 %v774
        %v788 = vpop.f32.mrf.mxu0
        %v789 = vadd.f32 0.0, %v788
        %v790 = vpop.f32.mrf.mxu0
        %791 = vdwg.mxu0
        %v792 = vpack.c.bf16 %v789, %v789
        %794 = vrot.lane.b32.xlu0 %v792, 24
        %v795 = vpop.permute.xlu0 %794
        %vm797 = vcmask 257216
        %798 = vst.msk [vmem:[#allocation2] sm:$0xf] %vm797, %v795
        %v799 = vld [vmem:[#allocation2] sm:$0xf]
        %v800 = vld [vmem:[%s4] sm:$0xf]
        %v801 = vld [vmem:[%s4 + $0x4] sm:$0xf]
        %v802 = vld [vmem:[%s4 + $0x8] sm:$0xf]
        %v803 = vld [vmem:[%s4 + $0xc] sm:$0xf]
        %v808 = vunpack.c.l.b16 %v800
        %v809 = vunpack.c.l.b16 %v801
        %v810 = vunpack.c.l.b16 %v802
        %v811 = vunpack.c.l.b16 %v803
        %v812 = vpack.c.b16 %v809, %v808
        %v813 = vpack.c.b16 %v811, %v810
        %v817 = vsel %vm414, %v799, 0
        %819 = vmatpush.bf16.msra.mxu0 0
        %820 = vmatpush.bf16.msra.mxu0 0
        %821 = vmatpush.bf16.msra.mxu0 0
        %822 = vmatpush.bf16.msra.mxu0 0
        %823 = vmatpush.bf16.msra.mxu0 0
        %824 = vmatpush.bf16.msra.mxu0 0
        %825 = vmatpush.bf16.msra.mxu0 %v813
        %826 = vmatpush.bf16.msra.mxu0 %v812
        %827 = vmatmul.bf16.gmra.mxu0 %v817
        %v828 = vpop.f32.mrf.mxu0
        %v829 = vadd.f32 0.0, %v828
        %v830 = vpop.f32.mrf.mxu0
        %831 = vdwg.mxu0
        %v832 = vadd.f32 %v411, %v829
        %v833 = vld [vmem:[%s5] sm:$0x1]
        %v835 = vperm.slane %v833, 0
        %v837 = vadd.f32 %v832, %v835
        %v838 = vld [vmem:[%s6] sm:$0x1]
        %v839 = vld [vmem:[%s7] sm:$0x1]
        %v840 = vsel %vm414, %v837, 0.0
        %841 = vadd.xlane.f32.xlu0 %v840
        %v842 = vpop.xlane.xlu0 %841
        %v843 = vmul.f32 %v842, %v424
        %v844 = vsub.f32 %v837, %v843
        %v845 = vmul.f32 %v844, %v844
        %v846 = vsel %vm414, %v845, 0.0
        %847 = vadd.xlane.f32.xlu0 %v846
        %v848 = vpop.xlane.xlu0 %847
        %v849 = vmul.f32 %v848, %v424
        %v850 = vadd.f32 %v849, 1e-05
        %v851 = vrsqrt.pop %v850
        %v852 = vmul.f32 %v851, %v850
        %v853 = vmul.f32 %v852, %v851
        %v854 = vmul.f32 0.5, %v853
        %v855 = vsub.f32 1.5, %v854
        %v856 = vmul.f32 %v851, %v855
        %vm857 = vweird.f32 %v850
        %vm858 = vweird.f32 %v851
        %vm859 = vmor %vm857, %vm858
        %v860 = vsel %vm859, %v851, %v856
        %v861 = vmul.f32 %v844, %v860
        %v863 = vperm.slane %v838, 0
        %v865 = vmul.f32 %v861, %v863
        %v867 = vperm.slane %v839, 0
        %v869 = vadd.f32 %v865, %v867
        %v870 = vpack.c.bf16 %v869, %v869
        %v871 = vld [vmem:[%s8] sm:$0xf]
        %v872 = vld [vmem:[%s8 + $0x4] sm:$0xf]
        %v873 = vld [vmem:[%s8 + $0x8] sm:$0xf]
        %v874 = vld [vmem:[%s8 + $0xc] sm:$0xf]
        %v875 = vld [vmem:[%s9] sm:$0x1]
        %v877 = vperm.slane %v875, 0
        %v883 = vunpack.c.l.b16 %v871
        %v884 = vunpack.c.l.b16 %v872
        %v885 = vunpack.c.l.b16 %v873
        %v886 = vunpack.c.l.b16 %v874
        %v887 = vpack.c.b16 %v884, %v883
        %v888 = vpack.c.b16 %v886, %v885
        %v892 = vsel %vm414, %v870, 0
        %894 = vmatpush.bf16.msra.mxu0 0
        %895 = vmatpush.bf16.msra.mxu0 0
        %896 = vmatpush.bf16.msra.mxu0 0
        %897 = vmatpush.bf16.msra.mxu0 0
        %898 = vmatpush.bf16.msra.mxu0 0
        %899 = vmatpush.bf16.msra.mxu0 0
        %900 = vmatpush.bf16.msra.mxu0 %v888
        %901 = vmatpush.bf16.msra.mxu0 %v887
        %902 = vmatmul.bf16.gmra.mxu0 %v892
        %v903 = vpop.f32.mrf.mxu0
        %v904 = vadd.f32 %v877, %v903
        %v905 = vpop.f32.mrf.mxu0
        %906 = vdwg.mxu0
        %v907 = vmul.f32 %v904, 0.5
        %v908 = vmul.f32 %v904, %v904
        %v909 = vmul.f32 %v904, %v908
        %v910 = vmul.f32 %v909, 0.044715
        %v911 = vadd.f32 %v904, %v910
        %v912 = vmul.f32 %v911, 0.7978846
        %v913 = vtanh.pop %v912
        %v914 = vadd.f32 %v913, 1.0
        %v915 = vmul.f32 %v907, %v914
        %v916 = vpack.c.bf16 %v915, %v915
        %v917 = vld [vmem:[%s10] sm:$0xf]
        %v918 = vld [vmem:[%s10 + $0x4] sm:$0xf]
        %v919 = vld [vmem:[%s10 + $0x8] sm:$0xf]
        %v920 = vld [vmem:[%s10 + $0xc] sm:$0xf]
        %v921 = vld [vmem:[%s10 + $0x10] sm:$0xf]
        %v922 = vld [vmem:[%s10 + $0x14] sm:$0xf]
        %v923 = vld [vmem:[%s10 + $0x18] sm:$0xf]
        %v924 = vld [vmem:[%s10 + $0x1c] sm:$0xf]
        %v925 = vld [vmem:[%s10 + $0x20] sm:$0xf]
        %v926 = vld [vmem:[%s10 + $0x24] sm:$0xf]
        %v927 = vld [vmem:[%s10 + $0x28] sm:$0xf]
        %v928 = vld [vmem:[%s10 + $0x2c] sm:$0xf]
        %v929 = vld [vmem:[%s10 + $0x30] sm:$0xf]
        %v930 = vld [vmem:[%s10 + $0x34] sm:$0xf]
        %v931 = vld [vmem:[%s10 + $0x38] sm:$0xf]
        %v932 = vld [vmem:[%s10 + $0x3c] sm:$0xf]
        %v933 = vld [vmem:[%s11] sm:$0x1]
        %v935 = vperm.slane %v933, 0
        %v953 = vunpack.c.l.b16 %v917
        %v954 = vunpack.c.l.b16 %v918
        %v955 = vunpack.c.l.b16 %v919
        %v956 = vunpack.c.l.b16 %v920
        %v957 = vunpack.c.l.b16 %v921
        %v958 = vunpack.c.l.b16 %v922
        %v959 = vunpack.c.l.b16 %v923
        %v960 = vunpack.c.l.b16 %v924
        %v961 = vunpack.c.l.b16 %v925
        %v962 = vunpack.c.l.b16 %v926
        %v963 = vunpack.c.l.b16 %v927
        %v964 = vunpack.c.l.b16 %v928
        %v965 = vunpack.c.l.b16 %v929
        %v966 = vunpack.c.l.b16 %v930
        %v967 = vunpack.c.l.b16 %v931
        %v968 = vunpack.c.l.b16 %v932
        %v969 = vpack.c.b16 %v954, %v953
        %v970 = vpack.c.b16 %v956, %v955
        %v971 = vpack.c.b16 %v958, %v957
        %v972 = vpack.c.b16 %v960, %v959
        %v973 = vpack.c.b16 %v962, %v961
        %v974 = vpack.c.b16 %v964, %v963
        %v975 = vpack.c.b16 %v966, %v965
        %v976 = vpack.c.b16 %v968, %v967
        %985 = vmatpush.bf16.msra.mxu0 %v976
        %986 = vmatpush.bf16.msra.mxu0 %v975
        %987 = vmatpush.bf16.msra.mxu0 %v974
        %988 = vmatpush.bf16.msra.mxu0 %v973
        %989 = vmatpush.bf16.msra.mxu0 %v972
        %990 = vmatpush.bf16.msra.mxu0 %v971
        %991 = vmatpush.bf16.msra.mxu0 %v970
        %992 = vmatpush.bf16.msra.mxu0 %v969
        %993 = vmatmul.bf16.gmra.mxu0 %v916
        %v994 = vpop.f32.mrf.mxu0
        %v995 = vadd.f32 %v935, %v994
        %v996 = vpop.f32.mrf.mxu0
        %997 = vdwg.mxu0
        %v998 = vadd.f32 %v837, %v995
        %v999 = vpack.c.bf16 %v998, %v998
        %vm1000 = vcmask 257024
        %1001 = vst.msk [vmem:[%s404] sm:$0xf] %vm1000, %v999
        %s1002 = sand.u32 %s291, 1
        %s1003 = scalar_lea.sflag [#allocation4], %s1002
        %s1004 = sand.u32 %s291, 1
        %s1005 = smul.addr %s1004, 4
        %s1006 = scalar_lea.vmem [#allocation3], %s1005
        // Predicated region
        $region69: #{tpu_custom_call.1} parent=67 // pred_check
          %p1007 = pneg %p301
        $region70: #{tpu_custom_call.1} parent=67 // pred_check_branch
          %1009 = sbr.rel (%p1007) target = $region72
        $region71: #{tpu_custom_call.1} parent=67 // pred_region
          %1011 = vsyncadd %s1003, 0
          %s1012 = smul.addr %s26, 4
          %s1013 = scalar_lea.hbm %s12, %s1012
          %s1015 = sshll.u32 %s1006, 4
          %s1016 = int_to_ptr.vmem [resolvable:$true] %s1015
          %s1017 = sshll.u32 %s1013, 4
          %s1018 = int_to_ptr.hbm [resolvable:$true] %s1017
          %1020 = dma.vmem_to_hbm [thread:$0]  %s1016, 64, %s1018, %s1003
        $region72: #{tpu_custom_call.1} parent=67 // pred_fallthru
          _
      $region68: #{tpu_custom_call.1} parent=5 // pred_fallthru
        _
      %p1021 = scmp.le.s32.totalorder 2, %s21
      // Predicated region
      $region73: #{tpu_custom_call.1} parent=5 // pred_check
        %p1022 = pneg %p1021
      $region74: #{tpu_custom_call.1} parent=5 // pred_check_branch
        %1024 = sbr.rel (%p1022) target = $region76
      $region75: #{tpu_custom_call.1} parent=5 // pred_region
        %s1025 = ssub.s32 %s21, 2
        // Predicated region
        $region77: #{tpu_custom_call.1} parent=75 // pred_check
          %p1026 = pneg %p307
        $region78: #{tpu_custom_call.1} parent=75 // pred_check_branch
          %1028 = sbr.rel (%p1026) target = $region80
        $region79: #{tpu_custom_call.1} parent=75 // pred_region
          %s1029 = sand.u32 %s292, 1
          %s1030 = scalar_lea.sflag [#allocation4], %s1029
          %s1031 = sand.u32 %s292, 1
          %s1032 = smul.addr %s1031, 4
          %s1033 = scalar_lea.vmem [#allocation3], %s1032
          %1035 = dma.done %s1030, 64
        $region80: #{tpu_custom_call.1} parent=75 // pred_fallthru
          _
      $region76: #{tpu_custom_call.1} parent=5 // pred_fallthru
        _
    $region6: #{tpu_custom_call.1} parent=1 // loop_footer
      %s25 = sadd.s32 1, %s21
    $region7: #{tpu_custom_call.1} parent=1 // loop_footer_branch
      %20 = sbr.rel target = $region3
    $region8: #{tpu_custom_call.1} parent=1 // loop_exit
      _
    %1036 = vsyncpa [#allocation4], 1
    %s1037 = scalar_lea.sflag [#allocation4], 1
    %1038 = vsyncpa %s1037, 1

// kernel: tpu_custom_call.1
$region0: #{tpu_custom_call.1}
  #allocation0 [shape = 'u32[]', space=smem, size = 0x4, offset = 0x4, fixed_abs, tag = 'smem constant byte address 0x4 - core index']
  #allocation1 [shape = 'u32[72,128]{1,0:T(1,128)}', space=vmem, size = 0x9000, scoped, tag = 'internal scratch']
  #allocation2 [shape = 'bf16[8,32]{1,0:T(8,128)(2,1)}', space=vmem, size = 0x800, scoped, tag = 'scratch operand']
  %s0 = inlined_call_operand.vmem [shape: bf16[2,8,32], index: 0, kind: input, shape index: {}]
  %s1 = inlined_call_operand.vmem [shape: f32[1,32], index: 1, kind: input, shape index: {}]
  %s2 = inlined_call_operand.vmem [shape: f32[1,32], index: 2, kind: input, shape index: {}]
  %s3 = inlined_call_operand.vmem [shape: bf16[32,96], index: 3, kind: input, shape index: {}]
  %s4 = inlined_call_operand.vmem [shape: bf16[32,32], index: 4, kind: input, shape index: {}]
  %s5 = inlined_call_operand.vmem [shape: f32[1,32], index: 5, kind: input, shape index: {}]
  %s6 = inlined_call_operand.vmem [shape: f32[1,32], index: 6, kind: input, shape index: {}]
  %s7 = inlined_call_operand.vmem [shape: f32[1,32], index: 7, kind: input, shape index: {}]
  %s8 = inlined_call_operand.vmem [shape: bf16[32,128], index: 8, kind: input, shape index: {}]
  %s9 = inlined_call_operand.vmem [shape: f32[1,128], index: 9, kind: input, shape index: {}]
  %s10 = inlined_call_operand.vmem [shape: bf16[128,32], index: 10, kind: input, shape index: {}]
  %s11 = inlined_call_operand.vmem [shape: f32[1,32], index: 11, kind: input, shape index: {}]
  %s12 = inlined_call_operand.hbm [shape: bf16[2,8,32], index: 12, kind: output, shape index: {}]
  %s13 = sld [smem:[#allocation0]]
  $region81: #{tpu_custom_call.1} parent=0
    _
  %s15 = ssub.s32 1, %s13
  %s16 = scalar_select 0, %s15, %s13
  $region1: #{tpu_custom_call.1} parent=0
    #allocation3 [shape = 'u8[4096]{0}', space=vmem, size = 0x1000, scoped, tag = 'output window, operand 0']
    #allocation4 [shape = 's32[2]{0}', space=sflag, size = 0x8, scoped, tag = 'scoped memory for tpu_custom_call.1']
    %17 = vsyncpa [#allocation4], 0
    %s18 = scalar_lea.sflag [#allocation4], 1
    %19 = vsyncpa %s18, 0
    loop: start=0, step=1, limit=4
    $region2: #{tpu_custom_call.1} parent=1 // loop_pre_header
      _
    $region3: #{tpu_custom_call.1} parent=1 // loop_header
      %s21 = sphi 0, %s25
      %p22 = scmp.ge.s32.totalorder %s21, 4
      %s31 = sphi 0, %s33
      %s34 = sphi 0, %s31
      %s35 = sphi 0, %s34
      %s51 = sphi 0, %s35
      %s55 = sphi 0, %s55
      %s57 = sphi 0, %s55
      %s58 = sphi 0, %s57
      %s72 = sphi 0, %s58
      %s76 = sphi 0, %s76
      %s78 = sphi 0, %s76
      %s79 = sphi 0, %s78
      %s93 = sphi 0, %s79
      %s97 = sphi 0, %s97
      %s99 = sphi 0, %s97
      %s100 = sphi 0, %s99
      %s114 = sphi 0, %s100
      %s118 = sphi 0, %s118
      %s120 = sphi 0, %s118
      %s121 = sphi 0, %s120
      %s135 = sphi 0, %s121
      %s139 = sphi 0, %s139
      %s141 = sphi 0, %s139
      %s142 = sphi 0, %s141
      %s156 = sphi 0, %s142
      %s160 = sphi 0, %s160
      %s162 = sphi 0, %s160
      %s163 = sphi 0, %s162
      %s177 = sphi 0, %s163
      %s181 = sphi 0, %s181
      %s183 = sphi 0, %s181
      %s184 = sphi 0, %s183
      %s198 = sphi 0, %s184
      %s202 = sphi 0, %s202
      %s204 = sphi 0, %s202
      %s205 = sphi 0, %s204
      %s219 = sphi 0, %s205
      %s223 = sphi 0, %s223
      %s225 = sphi 0, %s223
      %s226 = sphi 0, %s225
      %s240 = sphi 0, %s226
      %s244 = sphi 0, %s244
      %s246 = sphi 0, %s244
      %s247 = sphi 0, %s246
      %s261 = sphi 0, %s247
      %s265 = sphi 0, %s265
      %s267 = sphi 0, %s265
      %s268 = sphi 0, %s267
      %s282 = sphi 0, %s268
      %s288 = sphi 0, %s290
      %s291 = sphi 0, %s288
      %s292 = sphi 0, %s291
      %s308 = sphi 0, %s292
    $region4: #{tpu_custom_call.1} parent=1 // loop_header_branch
      %24 = sbr.rel (%p22) target = $region8
    $region5: #{tpu_custom_call.1} parent=1 // loop_body
      %s26 = ssub.s32 %s21, 1
      %s27 = ssub.s32 %s21, 2
      %s28 = sadd.s32 %s21, 1
      %s29 = ssub.s32 %s21, %s28
      %p30 = scmp.eq.s32.totalorder %s29, 0
      %s32 = sadd.s32 %s31, 1
      %s33 = scalar_select %p30, %s31, %s32
      %p36 = pneg %p30
      %p37 = scmp.eq.s32.totalorder %s21, 1
      %p38 = por %p36, %p37
      %p39 = scmp.ne.s32.totalorder %s31, %s34
      %p40 = scmp.eq.s32.totalorder %s21, 0
      %p41 = por %p39, %p40
      %p42 = scmp.ne.s32.totalorder %s31, %s34
      %p43 = scmp.eq.s32.totalorder %s26, 1
      %p44 = por %p42, %p43
      %p45 = scmp.ne.s32.totalorder %s34, %s35
      %p46 = scmp.eq.s32.totalorder %s26, 0
      %p47 = por %p45, %p46
      %p48 = scmp.ne.s32.totalorder %s34, %s35
      %p49 = scmp.eq.s32.totalorder %s27, 1
      %p50 = por %p48, %p49
      %p52 = scmp.ne.s32.totalorder %s35, %s51
      %p53 = scmp.eq.s32.totalorder %s27, 0
      %p54 = por %p52, %p53
      %s56 = sadd.s32 %s55, 1
      %p59 = scmp.eq.s32.totalorder %s21, 1
      %p60 = scmp.ne.s32.totalorder %s55, %s57
      %p61 = scmp.eq.s32.totalorder %s21, 0
      %p62 = por %p60, %p61
      %p63 = scmp.ne.s32.totalorder %s55, %s57
      %p64 = scmp.eq.s32.totalorder %s26, 1
      %p65 = por %p63, %p64
      %p66 = scmp.ne.s32.totalorder %s57, %s58
      %p67 = scmp.eq.s32.totalorder %s26, 0
      %p68 = por %p66, %p67
      %p69 = scmp.ne.s32.totalorder %s57, %s58
      %p70 = scmp.eq.s32.totalorder %s27, 1
      %p71 = por %p69, %p70
      %p73 = scmp.ne.s32.totalorder %s58, %s72
      %p74 = scmp.eq.s32.totalorder %s27, 0
      %p75 = por %p73, %p74
      %s77 = sadd.s32 %s76, 1
      %p80 = scmp.eq.s32.totalorder %s21, 1
      %p81 = scmp.ne.s32.totalorder %s76, %s78
      %p82 = scmp.eq.s32.totalorder %s21, 0
      %p83 = por %p81, %p82
      %p84 = scmp.ne.s32.totalorder %s76, %s78
      %p85 = scmp.eq.s32.totalorder %s26, 1
      %p86 = por %p84, %p85
      %p87 = scmp.ne.s32.totalorder %s78, %s79
      %p88 = scmp.eq.s32.totalorder %s26, 0
      %p89 = por %p87, %p88
      %p90 = scmp.ne.s32.totalorder %s78, %s79
      %p91 = scmp.eq.s32.totalorder %s27, 1
      %p92 = por %p90, %p91
      %p94 = scmp.ne.s32.totalorder %s79, %s93
      %p95 = scmp.eq.s32.totalorder %s27, 0
      %p96 = por %p94, %p95
      %s98 = sadd.s32 %s97, 1
      %p101 = scmp.eq.s32.totalorder %s21, 1
      %p102 = scmp.ne.s32.totalorder %s97, %s99
      %p103 = scmp.eq.s32.totalorder %s21, 0
      %p104 = por %p102, %p103
      %p105 = scmp.ne.s32.totalorder %s97, %s99
      %p106 = scmp.eq.s32.totalorder %s26, 1
      %p107 = por %p105, %p106
      %p108 = scmp.ne.s32.totalorder %s99, %s100
      %p109 = scmp.eq.s32.totalorder %s26, 0
      %p110 = por %p108, %p109
      %p111 = scmp.ne.s32.totalorder %s99, %s100
      %p112 = scmp.eq.s32.totalorder %s27, 1
      %p113 = por %p111, %p112
      %p115 = scmp.ne.s32.totalorder %s100, %s114
      %p116 = scmp.eq.s32.totalorder %s27, 0
      %p117 = por %p115, %p116
      %s119 = sadd.s32 %s118, 1
      %p122 = scmp.eq.s32.totalorder %s21, 1
      %p123 = scmp.ne.s32.totalorder %s118, %s120
      %p124 = scmp.eq.s32.totalorder %s21, 0
      %p125 = por %p123, %p124
      %p126 = scmp.ne.s32.totalorder %s118, %s120
      %p127 = scmp.eq.s32.totalorder %s26, 1
      %p128 = por %p126, %p127
      %p129 = scmp.ne.s32.totalorder %s120, %s121
      %p130 = scmp.eq.s32.totalorder %s26, 0
      %p131 = por %p129, %p130
      %p132 = scmp.ne.s32.totalorder %s120, %s121
      %p133 = scmp.eq.s32.totalorder %s27, 1
      %p134 = por %p132, %p133
      %p136 = scmp.ne.s32.totalorder %s121, %s135
      %p137 = scmp.eq.s32.totalorder %s27, 0
      %p138 = por %p136, %p137
      %s140 = sadd.s32 %s139, 1
      %p143 = scmp.eq.s32.totalorder %s21, 1
      %p144 = scmp.ne.s32.totalorder %s139, %s141
      %p145 = scmp.eq.s32.totalorder %s21, 0
      %p146 = por %p144, %p145
      %p147 = scmp.ne.s32.totalorder %s139, %s141
      %p148 = scmp.eq.s32.totalorder %s26, 1
      %p149 = por %p147, %p148
      %p150 = scmp.ne.s32.totalorder %s141, %s142
      %p151 = scmp.eq.s32.totalorder %s26, 0
      %p152 = por %p150, %p151
      %p153 = scmp.ne.s32.totalorder %s141, %s142
      %p154 = scmp.eq.s32.totalorder %s27, 1
      %p155 = por %p153, %p154
      %p157 = scmp.ne.s32.totalorder %s142, %s156
      %p158 = scmp.eq.s32.totalorder %s27, 0
      %p159 = por %p157, %p158
      %s161 = sadd.s32 %s160, 1
      %p164 = scmp.eq.s32.totalorder %s21, 1
      %p165 = scmp.ne.s32.totalorder %s160, %s162
      %p166 = scmp.eq.s32.totalorder %s21, 0
      %p167 = por %p165, %p166
      %p168 = scmp.ne.s32.totalorder %s160, %s162
      %p169 = scmp.eq.s32.totalorder %s26, 1
      %p170 = por %p168, %p169
      %p171 = scmp.ne.s32.totalorder %s162, %s163
      %p172 = scmp.eq.s32.totalorder %s26, 0
      %p173 = por %p171, %p172
      %p174 = scmp.ne.s32.totalorder %s162, %s163
      %p175 = scmp.eq.s32.totalorder %s27, 1
      %p176 = por %p174, %p175
      %p178 = scmp.ne.s32.totalorder %s163, %s177
      %p179 = scmp.eq.s32.totalorder %s27, 0
      %p180 = por %p178, %p179
      %s182 = sadd.s32 %s181, 1
      %p185 = scmp.eq.s32.totalorder %s21, 1
      %p186 = scmp.ne.s32.totalorder %s181, %s183
      %p187 = scmp.eq.s32.totalorder %s21, 0
      %p188 = por %p186, %p187
      %p189 = scmp.ne.s32.totalorder %s181, %s183
      %p190 = scmp.eq.s32.totalorder %s26, 1
      %p191 = por %p189, %p190
      %p192 = scmp.ne.s32.totalorder %s183, %s184
      %p193 = scmp.eq.s32.totalorder %s26, 0
      %p194 = por %p192, %p193
      %p195 = scmp.ne.s32.totalorder %s183, %s184
      %p196 = scmp.eq.s32.totalorder %s27, 1
      %p197 = por %p195, %p196
      %p199 = scmp.ne.s32.totalorder %s184, %s198
      %p200 = scmp.eq.s32.totalorder %s27, 0
      %p201 = por %p199, %p200
      %s203 = sadd.s32 %s202, 1
      %p206 = scmp.eq.s32.totalorder %s21, 1
      %p207 = scmp.ne.s32.totalorder %s202, %s204
      %p208 = scmp.eq.s32.totalorder %s21, 0
      %p209 = por %p207, %p208
      %p210 = scmp.ne.s32.totalorder %s202, %s204
      %p211 = scmp.eq.s32.totalorder %s26, 1
      %p212 = por %p210, %p211
      %p213 = scmp.ne.s32.totalorder %s204, %s205
      %p214 = scmp.eq.s32.totalorder %s26, 0
      %p215 = por %p213, %p214
      %p216 = scmp.ne.s32.totalorder %s204, %s205
      %p217 = scmp.eq.s32.totalorder %s27, 1
      %p218 = por %p216, %p217
      %p220 = scmp.ne.s32.totalorder %s205, %s219
      %p221 = scmp.eq.s32.totalorder %s27, 0
      %p222 = por %p220, %p221
      %s224 = sadd.s32 %s223, 1
      %p227 = scmp.eq.s32.totalorder %s21, 1
      %p228 = scmp.ne.s32.totalorder %s223, %s225
      %p229 = scmp.eq.s32.totalorder %s21, 0
      %p230 = por %p228, %p229
      %p231 = scmp.ne.s32.totalorder %s223, %s225
      %p232 = scmp.eq.s32.totalorder %s26, 1
      %p233 = por %p231, %p232
      %p234 = scmp.ne.s32.totalorder %s225, %s226
      %p235 = scmp.eq.s32.totalorder %s26, 0
      %p236 = por %p234, %p235
      %p237 = scmp.ne.s32.totalorder %s225, %s226
      %p238 = scmp.eq.s32.totalorder %s27, 1
      %p239 = por %p237, %p238
      %p241 = scmp.ne.s32.totalorder %s226, %s240
      %p242 = scmp.eq.s32.totalorder %s27, 0
      %p243 = por %p241, %p242
      %s245 = sadd.s32 %s244, 1
      %p248 = scmp.eq.s32.totalorder %s21, 1
      %p249 = scmp.ne.s32.totalorder %s244, %s246
      %p250 = scmp.eq.s32.totalorder %s21, 0
      %p251 = por %p249, %p250
      %p252 = scmp.ne.s32.totalorder %s244, %s246
      %p253 = scmp.eq.s32.totalorder %s26, 1
      %p254 = por %p252, %p253
      %p255 = scmp.ne.s32.totalorder %s246, %s247
      %p256 = scmp.eq.s32.totalorder %s26, 0
      %p257 = por %p255, %p256
      %p258 = scmp.ne.s32.totalorder %s246, %s247
      %p259 = scmp.eq.s32.totalorder %s27, 1
      %p260 = por %p258, %p259
      %p262 = scmp.ne.s32.totalorder %s247, %s261
      %p263 = scmp.eq.s32.totalorder %s27, 0
      %p264 = por %p262, %p263
      %s266 = sadd.s32 %s265, 1
      %p269 = scmp.eq.s32.totalorder %s21, 1
      %p270 = scmp.ne.s32.totalorder %s265, %s267
      %p271 = scmp.eq.s32.totalorder %s21, 0
      %p272 = por %p270, %p271
      %p273 = scmp.ne.s32.totalorder %s265, %s267
      %p274 = scmp.eq.s32.totalorder %s26, 1
      %p275 = por %p273, %p274
      %p276 = scmp.ne.s32.totalorder %s267, %s268
      %p277 = scmp.eq.s32.totalorder %s26, 0
      %p278 = por %p276, %p277
      %p279 = scmp.ne.s32.totalorder %s267, %s268
      %p280 = scmp.eq.s32.totalorder %s27, 1
      %p281 = por %p279, %p280
      %p283 = scmp.ne.s32.totalorder %s268, %s282
      %p284 = scmp.eq.s32.totalorder %s27, 0
      %p285 = por %p283, %p284
      %s286 = ssub.s32 %s21, %s28
      %p287 = scmp.eq.s32.totalorder %s286, 0
      %s289 = sadd.s32 %s288, 1
      %s290 = scalar_select %p287, %s288, %s289
      %p293 = pneg %p287
      %p294 = scmp.eq.s32.totalorder %s21, 1
      %p295 = por %p293, %p294
      %p296 = scmp.ne.s32.totalorder %s288, %s291
      %p297 = scmp.eq.s32.totalorder %s21, 0
      %p298 = por %p296, %p297
      %p299 = scmp.ne.s32.totalorder %s288, %s291
      %p300 = scmp.eq.s32.totalorder %s26, 1
      %p301 = por %p299, %p300
      %p302 = scmp.ne.s32.totalorder %s291, %s292
      %p303 = scmp.eq.s32.totalorder %s26, 0
      %p304 = por %p302, %p303
      %p305 = scmp.ne.s32.totalorder %s291, %s292
      %p306 = scmp.eq.s32.totalorder %s27, 1
      %p307 = por %p305, %p306
      %p309 = scmp.ne.s32.totalorder %s292, %s308
      %p310 = scmp.eq.s32.totalorder %s27, 0
      %p311 = por %p309, %p310
      %p312 = scmp.le.s32.totalorder 1, %s21
      %p313 = scmp.lt.s32.totalorder %s21, 3
      %p314 = pnand %p312, %p313
      %p315 = pneg %p314
      // Predicated region
      $region9: #{tpu_custom_call.1} parent=5 // pred_check
        _
      $region10: #{tpu_custom_call.1} parent=5 // pred_check_branch
        %317 = sbr.rel (%p314) target = $region12
      $region11: #{tpu_custom_call.1} parent=5 // pred_region
        %s318 = ssub.s32 %s21, 1
        // Predicated region
        $region13: #{tpu_custom_call.1} parent=11 // pred_check
          %p319 = pneg %p68
        $region14: #{tpu_custom_call.1} parent=11 // pred_check_branch
          %321 = sbr.rel (%p319) target = $region16
        $region15: #{tpu_custom_call.1} parent=11 // pred_region
          _
        $region16: #{tpu_custom_call.1} parent=11 // pred_fallthru
          _
        // Predicated region
        $region17: #{tpu_custom_call.1} parent=11 // pred_check
          %p322 = pneg %p89
        $region18: #{tpu_custom_call.1} parent=11 // pred_check_branch
          %324 = sbr.rel (%p322) target = $region20
        $region19: #{tpu_custom_call.1} parent=11 // pred_region
          _
        $region20: #{tpu_custom_call.1} parent=11 // pred_fallthru
          _
        // Predicated region
        $region21: #{tpu_custom_call.1} parent=11 // pred_check
          %p325 = pneg %p110
        $region22: #{tpu_custom_call.1} parent=11 // pred_check_branch
          %327 = sbr.rel (%p325) target = $region24
        $region23: #{tpu_custom_call.1} parent=11 // pred_region
          _
        $region24: #{tpu_custom_call.1} parent=11 // pred_fallthru
          _
        // Predicated region
        $region25: #{tpu_custom_call.1} parent=11 // pred_check
          %p328 = pneg %p131
        $region26: #{tpu_custom_call.1} parent=11 // pred_check_branch
          %330 = sbr.rel (%p328) target = $region28
        $region27: #{tpu_custom_call.1} parent=11 // pred_region
          _
        $region28: #{tpu_custom_call.1} parent=11 // pred_fallthru
          _
        // Predicated region
        $region29: #{tpu_custom_call.1} parent=11 // pred_check
          %p331 = pneg %p152
        $region30: #{tpu_custom_call.1} parent=11 // pred_check_branch
          %333 = sbr.rel (%p331) target = $region32
        $region31: #{tpu_custom_call.1} parent=11 // pred_region
          _
        $region32: #{tpu_custom_call.1} parent=11 // pred_fallthru
          _
        // Predicated region
        $region33: #{tpu_custom_call.1} parent=11 // pred_check
          %p334 = pneg %p173
        $region34: #{tpu_custom_call.1} parent=11 // pred_check_branch
          %336 = sbr.rel (%p334) target = $region36
        $region35: #{tpu_custom_call.1} parent=11 // pred_region
          _
        $region36: #{tpu_custom_call.1} parent=11 // pred_fallthru
          _
        // Predicated region
        $region37: #{tpu_custom_call.1} parent=11 // pred_check
          %p337 = pneg %p194
        $region38: #{tpu_custom_call.1} parent=11 // pred_check_branch
          %339 = sbr.rel (%p337) target = $region40
        $region39: #{tpu_custom_call.1} parent=11 // pred_region
          _
        $region40: #{tpu_custom_call.1} parent=11 // pred_fallthru
          _
        // Predicated region
        $region41: #{tpu_custom_call.1} parent=11 // pred_check
          %p340 = pneg %p215
        $region42: #{tpu_custom_call.1} parent=11 // pred_check_branch
          %342 = sbr.rel (%p340) target = $region44
        $region43: #{tpu_custom_call.1} parent=11 // pred_region
          _
        $region44: #{tpu_custom_call.1} parent=11 // pred_fallthru
          _
        // Predicated region
        $region45: #{tpu_custom_call.1} parent=11 // pred_check
          %p343 = pneg %p236
        $region46: #{tpu_custom_call.1} parent=11 // pred_check_branch
          %345 = sbr.rel (%p343) target = $region48
        $region47: #{tpu_custom_call.1} parent=11 // pred_region
          _
        $region48: #{tpu_custom_call.1} parent=11 // pred_fallthru
          _
        // Predicated region
        $region49: #{tpu_custom_call.1} parent=11 // pred_check
          %p346 = pneg %p257
        $region50: #{tpu_custom_call.1} parent=11 // pred_check_branch
          %348 = sbr.rel (%p346) target = $region52
        $region51: #{tpu_custom_call.1} parent=11 // pred_region
          _
        $region52: #{tpu_custom_call.1} parent=11 // pred_fallthru
          _
        // Predicated region
        $region53: #{tpu_custom_call.1} parent=11 // pred_check
          %p349 = pneg %p278
        $region54: #{tpu_custom_call.1} parent=11 // pred_check_branch
          %351 = sbr.rel (%p349) target = $region56
        $region55: #{tpu_custom_call.1} parent=11 // pred_region
          _
        $region56: #{tpu_custom_call.1} parent=11 // pred_fallthru
          _
      $region12: #{tpu_custom_call.1} parent=5 // pred_fallthru
        _
      %p352 = scmp.lt.s32.totalorder %s21, 2
      // Predicated region
      $region57: #{tpu_custom_call.1} parent=5 // pred_check
        %p353 = pneg %p352
      $region58: #{tpu_custom_call.1} parent=5 // pred_check_branch
        %355 = sbr.rel (%p353) target = $region60
      $region59: #{tpu_custom_call.1} parent=5 // pred_region
        // Predicated region
        $region61: #{tpu_custom_call.1} parent=59 // pred_check
          %p356 = pneg %p41
        $region62: #{tpu_custom_call.1} parent=59 // pred_check_branch
          %358 = sbr.rel (%p356) target = $region64
        $region63: #{tpu_custom_call.1} parent=59 // pred_region
          %p359 = scmp.lt.s32.totalorder %s21, 1
          %s360 = scalar_select %p359, %s21, 1
          %s361 = smul.addr %s360, 4
          %s362 = scalar_lea.vmem %s0, %s361
        $region64: #{tpu_custom_call.1} parent=59 // pred_fallthru
          _
      $region60: #{tpu_custom_call.1} parent=5 // pred_fallthru
        _
      %p363 = scmp.le.s32.totalorder 1, %s21
      %p364 = scmp.lt.s32.totalorder %s21, 3
      %p365 = pnand %p363, %p364
      %p366 = pneg %p365
      // Predicated region
      $region65: #{tpu_custom_call.1} parent=5 // pred_check
        _
      $region66: #{tpu_custom_call.1} parent=5 // pred_check_branch
        %368 = sbr.rel (%p365) target = $region68
      $region67: #{tpu_custom_call.1} parent=5 // pred_region
        %s369 = ssub.s32 %s21, 1
        %p370 = scmp.lt.s32.totalorder %s26, 1
        %s371 = scalar_select %p370, %s26, 1
        %s372 = smul.addr %s371, 4
        %s373 = scalar_lea.vmem %s0, %s372
        %p374 = pneg %p47
        %p375 = pneg %p44
        %p376 = pneg %p68
        %p377 = pneg %p65
        %p378 = pneg %p89
        %p379 = pneg %p86
        %p380 = pneg %p110
        %p381 = pneg %p107
        %p382 = pneg %p131
        %p383 = pneg %p128
        %p384 = pneg %p152
        %p385 = pneg %p149
        %p386 = pneg %p173
        %p387 = pneg %p170
        %p388 = pneg %p194
        %p389 = pneg %p191
        %p390 = pneg %p215
        %p391 = pneg %p212
        %p392 = pneg %p236
        %p393 = pneg %p233
        %p394 = pneg %p257
        %p395 = pneg %p254
        %p396 = pneg %p278
        %p397 = pneg %p275
        %p398 = pneg %p304
        %p399 = pneg %p301
        %s400 = sand.u32 %s291, 1
        %s401 = scalar_lea.sflag [#allocation4], %s400
        %s402 = sand.u32 %s291, 1
        %s403 = smul.addr %s402, 4
        %s404 = scalar_lea.vmem [#allocation3], %s403
        %p405 = scmp.lt.s32.totalorder %s26, 1
        %s406 = scalar_select %p405, %s26, 1
        %s407 = smul.addr %s406, 4
        %s408 = scalar_lea.vmem %s0, %s407
        %v410 = vld [vmem:[%s408] sm:$0xf]
        %v411 = vunpack.c.l.bf16 %v410
        %v412 = vld [vmem:[%s1] sm:$0x1]
        %v413 = vld [vmem:[%s2] sm:$0x1]
        %vm414 = vcmask 261120
        %v415 = vsel %vm414, %v411, 0.0
        %416 = vadd.xlane.f32.xlu0 %v415
        %v417 = vpop.xlane.xlu0 %416
        %v418 = vrcp.pop 32.0
        %v419 = vmul.f32 32.0, %v418
        %v420 = vsub.f32 1.0, %v419
        %v421 = vmul.f32 %v418, %v420
        %v422 = vadd.f32 %v418, %v421
        %vm423 = vweird.f32 %v418
        %v424 = vsel %vm423, %v418, %v422
        %v425 = vmul.f32 %v417, %v424
        %v426 = vsub.f32 %v411, %v425
        %v427 = vmul.f32 %v426, %v426
        %v428 = vsel %vm414, %v427, 0.0
        %429 = vadd.xlane.f32.xlu0 %v428
        %v430 = vpop.xlane.xlu0 %429
        %v431 = vmul.f32 %v430, %v424
        %v432 = vadd.f32 %v431, 1e-05
        %v433 = vrsqrt.pop %v432
        %v434 = vmul.f32 %v433, %v432
        %v435 = vmul.f32 %v434, %v433
        %v436 = vmul.f32 0.5, %v435
        %v437 = vsub.f32 1.5, %v436
        %v438 = vmul.f32 %v433, %v437
        %vm439 = vweird.f32 %v432
        %vm440 = vweird.f32 %v433
        %vm441 = vmor %vm439, %vm440
        %v442 = vsel %vm441, %v433, %v438
        %v443 = vmul.f32 %v426, %v442
        %v445 = vperm.slane %v412, 0
        %v447 = vmul.f32 %v443, %v445
        %v449 = vperm.slane %v413, 0
        %v451 = vadd.f32 %v447, %v449
        %v452 = vpack.c.bf16 %v451, %v451
        %v453 = vld [vmem:[%s3] sm:$0xf]
        %v454 = vld [vmem:[%s3 + $0x4] sm:$0xf]
        %v455 = vld [vmem:[%s3 + $0x8] sm:$0xf]
        %v456 = vld [vmem:[%s3 + $0xc] sm:$0xf]
        %v461 = vunpack.c.l.b16 %v453
        %v462 = vunpack.c.l.b16 %v454
        %v463 = vunpack.c.l.b16 %v455
        %v464 = vunpack.c.l.b16 %v456
        %v465 = vpack.c.b16 %v462, %v461
        %v466 = vpack.c.b16 %v464, %v463
        %v470 = vsel %vm414, %v452, 0
        %472 = vmatpush.bf16.msra.mxu0 0
        %473 = vmatpush.bf16.msra.mxu0 0
        %474 = vmatpush.bf16.msra.mxu0 0
        %475 = vmatpush.bf16.msra.mxu0 0
        %476 = vmatpush.bf16.msra.mxu0 0
        %477 = vmatpush.bf16.msra.mxu0 0
        %478 = vmatpush.bf16.msra.mxu0 %v466
        %479 = vmatpush.bf16.msra.mxu0 %v465
        %480 = vmatmul.bf16.gmra.mxu0 %v470
        %v481 = vpop.f32.mrf.mxu0
        %v482 = vadd.f32 0.0, %v481
        %v483 = vpop.f32.mrf.mxu0
        %484 = vdwg.mxu0
        %v485 = vmul.f32 %v482, 0.35355338
        %v486 = vlaneseq
        %v487 = vshrl.u32 %v486, 7
        %v488 = vlaneseq
        %v489 = vand.u32 %v488, 127
        %vm490 = vcmp.le.s32.totalorder %v489, %v487
        %v491 = vpack.c.bf16 %v485, %v485
        %v492 = vpack.c.bf16 %v482, %v482
        %494 = vrot.lane.b32.xlu0 %v492, 96
        %v495 = vpop.permute.xlu0 %494
        %vm496 = vcmask 64512
        %v498 = vsel %vm496, %v491, 0
        %v501 = vsel %vm496, %v495, 0
        %503 = vmatpush.bf16.xpose.msra.mxu0 0
        %504 = vmatpush.bf16.xpose.msra.mxu0 0
        %505 = vmatpush.bf16.xpose.msra.mxu0 0
        %506 = vmatpush.bf16.xpose.msra.mxu0 0
        %507 = vmatpush.bf16.xpose.msra.mxu0 0
        %508 = vmatpush.bf16.xpose.msra.mxu0 0
        %509 = vmatpush.bf16.xpose.msra.mxu0 0
        %510 = vmatpush.bf16.xpose.msra.mxu0 %v501
        %511 = vmatmul.bf16.gmra.mxu0 %v498
        %v512 = vpop.f32.mrf.mxu0
        %v513 = vadd.f32 0.0, %v512
        %v514 = vpop.f32.mrf.mxu0
        %515 = vdwg.mxu0
        %v516 = vsel %vm490, %v513, -1e+30
        %v517 = vsel %vm496, %v516, -inf
        %518 = vmax.xlane.f32.xlu0 %v517
        %v519 = vpop.xlane.xlu0 %518
        %v520 = vsub.f32 %v516, %v519
        %v521 = vmul.f32 %v520, 1.442695
        %v522 = vpow.pop %v521
        %v523 = vsel %vm496, %v522, 0.0
        %524 = vadd.xlane.f32.xlu0 %v523
        %v525 = vpop.xlane.xlu0 %524
        %v526 = vrcp.pop %v525
        %v527 = vmul.f32 %v525, %v526
        %v528 = vsub.f32 1.0, %v527
        %v529 = vmul.f32 %v526, %v528
        %v530 = vadd.f32 %v526, %v529
        %vm531 = vweird.f32 %v525
        %vm532 = vweird.f32 %v526
        %vm533 = vmor %vm531, %vm532
        %v534 = vsel %vm533, %v526, %v530
        %v535 = vand.u32 2147483647, %v525
        %vm536 = vcmp.eq.f32.partialorder %v535, 8.507059e+37
        %v537 = vand.u32 %v525, 2147483648
        %v538 = vor.u32 1.1754944e-38, %v537
        %v539 = vsel %vm536, %v538, %v534
        %v540 = vmul.f32 %v522, %v539
        %v541 = vpack.c.bf16 %v540, %v540
        %542 = vrot.lane.b32.xlu0 %v492, 64
        %v543 = vpop.permute.xlu0 %542
        %v545 = vsel %vm496, %v541, 0
        %vm547 = vcmask 1043456
        %v549 = vsel %vm547, %v543, 0
        %551 = vmatpush.bf16.msra.mxu0 0
        %552 = vmatpush.bf16.msra.mxu0 0
        %553 = vmatpush.bf16.msra.mxu0 0
        %554 = vmatpush.bf16.msra.mxu0 0
        %555 = vmatpush.bf16.msra.mxu0 0
        %556 = vmatpush.bf16.msra.mxu0 0
        %557 = vmatpush.bf16.msra.mxu0 0
        %558 = vmatpush.bf16.msra.mxu0 %v549
        %559 = vmatmul.bf16.gmra.mxu0 %v545
        %v560 = vpop.f32.mrf.mxu0
        %v561 = vadd.f32 0.0, %v560
        %v562 = vpop.f32.mrf.mxu0
        %563 = vdwg.mxu0
        %v564 = vpack.c.bf16 %v561, %v561
        %vm565 = vcmask 60416
        %566 = vst.msk [vmem:[#allocation2] sm:$0xf] %vm565, %v564
        %568 = vrot.lane.b32.xlu0 %v491, 120
        %v569 = vpop.permute.xlu0 %568
        %570 = vrot.lane.b32.xlu0 %v492, 88
        %v571 = vpop.permute.xlu0 %570
        %v573 = vsel %vm496, %v569, 0
        %v576 = vsel %vm496, %v571, 0
        %578 = vmatpush.bf16.xpose.msra.mxu0 0
        %579 = vmatpush.bf16.xpose.msra.mxu0 0
        %580 = vmatpush.bf16.xpose.msra.mxu0 0
        %581 = vmatpush.bf16.xpose.msra.mxu0 0
        %582 = vmatpush.bf16.xpose.msra.mxu0 0
        %583 = vmatpush.bf16.xpose.msra.mxu0 0
        %584 = vmatpush.bf16.xpose.msra.mxu0 0
        %585 = vmatpush.bf16.xpose.msra.mxu0 %v576
        %586 = vmatmul.bf16.gmra.mxu0 %v573
        %v587 = vpop.f32.mrf.mxu0
        %v588 = vadd.f32 0.0, %v587
        %v589 = vpop.f32.mrf.mxu0
        %590 = vdwg.mxu0
        %v591 = vsel %vm490, %v588, -1e+30
        %v592 = vsel %vm496, %v591, -inf
        %593 = vmax.xlane.f32.xlu0 %v592
        %v594 = vpop.xlane.xlu0 %593
        %v595 = vsub.f32 %v591, %v594
        %v596 = vmul.f32 %v595, 1.442695
        %v597 = vpow.pop %v596
        %v598 = vsel %vm496, %v597, 0.0
        %599 = vadd.xlane.f32.xlu0 %v598
        %v600 = vpop.xlane.xlu0 %599
        %v601 = vrcp.pop %v600
        %v602 = vmul.f32 %v600, %v601
        %v603 = vsub.f32 1.0, %v602
        %v604 = vmul.f32 %v601, %v603
        %v605 = vadd.f32 %v601, %v604
        %vm606 = vweird.f32 %v600
        %vm607 = vweird.f32 %v601
        %vm608 = vmor %vm606, %vm607
        %v609 = vsel %vm608, %v601, %v605
        %v610 = vand.u32 2147483647, %v600
        %vm611 = vcmp.eq.f32.partialorder %v610, 8.507059e+37
        %v612 = vand.u32 %v600, 2147483648
        %v613 = vor.u32 1.1754944e-38, %v612
        %v614 = vsel %vm611, %v613, %v609
        %v615 = vmul.f32 %v597, %v614
        %v616 = vpack.c.bf16 %v615, %v615
        %617 = vrot.lane.b32.xlu0 %v492, 56
        %v618 = vpop.permute.xlu0 %617
        %v620 = vsel %vm496, %v616, 0
        %v623 = vsel %vm547, %v618, 0
        %625 = vmatpush.bf16.msra.mxu0 0
        %626 = vmatpush.bf16.msra.mxu0 0
        %627 = vmatpush.bf16.msra.mxu0 0
        %628 = vmatpush.bf16.msra.mxu0 0
        %629 = vmatpush.bf16.msra.mxu0 0
        %630 = vmatpush.bf16.msra.mxu0 0
        %631 = vmatpush.bf16.msra.mxu0 0
        %632 = vmatpush.bf16.msra.mxu0 %v623
        %633 = vmatmul.bf16.gmra.mxu0 %v620
        %v634 = vpop.f32.mrf.mxu0
        %v635 = vadd.f32 0.0, %v634
        %v636 = vpop.f32.mrf.mxu0
        %637 = vdwg.mxu0
        %v638 = vpack.c.bf16 %v635, %v635
        %640 = vrot.lane.b32.xlu0 %v638, 8
        %v641 = vpop.permute.xlu0 %640
        %vm643 = vcmask 126016
        %644 = vst.msk [vmem:[#allocation2] sm:$0xf] %vm643, %v641
        %645 = vrot.lane.b32.xlu0 %v491, 112
        %v646 = vpop.permute.xlu0 %645
        %647 = vrot.lane.b32.xlu0 %v492, 80
        %v648 = vpop.permute.xlu0 %647
        %v650 = vsel %vm496, %v646, 0
        %v653 = vsel %vm496, %v648, 0
        %655 = vmatpush.bf16.xpose.msra.mxu0 0
        %656 = vmatpush.bf16.xpose.msra.mxu0 0
        %657 = vmatpush.bf16.xpose.msra.mxu0 0
        %658 = vmatpush.bf16.xpose.msra.mxu0 0
        %659 = vmatpush.bf16.xpose.msra.mxu0 0
        %660 = vmatpush.bf16.xpose.msra.mxu0 0
        %661 = vmatpush.bf16.xpose.msra.mxu0 0
        %662 = vmatpush.bf16.xpose.msra.mxu0 %v653
        %663 = vmatmul.bf16.gmra.mxu0 %v650
        %v664 = vpop.f32.mrf.mxu0
        %v665 = vadd.f32 0.0, %v664
        %v666 = vpop.f32.mrf.mxu0
        %667 = vdwg.mxu0
        %v668 = vsel %vm490, %v665, -1e+30
        %v669 = vsel %vm496, %v668, -inf
        %670 = vmax.xlane.f32.xlu0 %v669
        %v671 = vpop.xlane.xlu0 %670
        %v672 = vsub.f32 %v668, %v671
        %v673 = vmul.f32 %v672, 1.442695
        %v674 = vpow.pop %v673
        %v675 = vsel %vm496, %v674, 0.0
        %676 = vadd.xlane.f32.xlu0 %v675
        %v677 = vpop.xlane.xlu0 %676
        %v678 = vrcp.pop %v677
        %v679 = vmul.f32 %v677, %v678
        %v680 = vsub.f32 1.0, %v679
        %v681 = vmul.f32 %v678, %v680
        %v682 = vadd.f32 %v678, %v681
        %vm683 = vweird.f32 %v677
        %vm684 = vweird.f32 %v678
        %vm685 = vmor %vm683, %vm684
        %v686 = vsel %vm685, %v678, %v682
        %v687 = vand.u32 2147483647, %v677
        %vm688 = vcmp.eq.f32.partialorder %v687, 8.507059e+37
        %v689 = vand.u32 %v677, 2147483648
        %v690 = vor.u32 1.1754944e-38, %v689
        %v691 = vsel %vm688, %v690, %v686
        %v692 = vmul.f32 %v674, %v691
        %v693 = vpack.c.bf16 %v692, %v692
        %694 = vrot.lane.b32.xlu0 %v492, 48
        %v695 = vpop.permute.xlu0 %694
        %v697 = vsel %vm496, %v693, 0
        %v700 = vsel %vm547, %v695, 0
        %702 = vmatpush.bf16.msra.mxu0 0
        %703 = vmatpush.bf16.msra.mxu0 0
        %704 = vmatpush.bf16.msra.mxu0 0
        %705 = vmatpush.bf16.msra.mxu0 0
        %706 = vmatpush.bf16.msra.mxu0 0
        %707 = vmatpush.bf16.msra.mxu0 0
        %708 = vmatpush.bf16.msra.mxu0 0
        %709 = vmatpush.bf16.msra.mxu0 %v700
        %710 = vmatmul.bf16.gmra.mxu0 %v697
        %v711 = vpop.f32.mrf.mxu0
        %v712 = vadd.f32 0.0, %v711
        %v713 = vpop.f32.mrf.mxu0
        %714 = vdwg.mxu0
        %v715 = vpack.c.bf16 %v712, %v712
        %717 = vrot.lane.b32.xlu0 %v715, 16
        %v718 = vpop.permute.xlu0 %717
        %vm720 = vcmask 191616
        %721 = vst.msk [vmem:[#allocation2] sm:$0xf] %vm720, %v718
        %722 = vrot.lane.b32.xlu0 %v491, 104
        %v723 = vpop.permute.xlu0 %722
        %724 = vrot.lane.b32.xlu0 %v492, 72
        %v725 = vpop.permute.xlu0 %724
        %v727 = vsel %vm496, %v723, 0
        %v730 = vsel %vm496, %v725, 0
        %732 = vmatpush.bf16.xpose.msra.mxu0 0
        %733 = vmatpush.bf16.xpose.msra.mxu0 0
        %734 = vmatpush.bf16.xpose.msra.mxu0 0
        %735 = vmatpush.bf16.xpose.msra.mxu0 0
        %736 = vmatpush.bf16.xpose.msra.mxu0 0
        %737 = vmatpush.bf16.xpose.msra.mxu0 0
        %738 = vmatpush.bf16.xpose.msra.mxu0 0
        %739 = vmatpush.bf16.xpose.msra.mxu0 %v730
        %740 = vmatmul.bf16.gmra.mxu0 %v727
        %v741 = vpop.f32.mrf.mxu0
        %v742 = vadd.f32 0.0, %v741
        %v743 = vpop.f32.mrf.mxu0
        %744 = vdwg.mxu0
        %v745 = vsel %vm490, %v742, -1e+30
        %v746 = vsel %vm496, %v745, -inf
        %747 = vmax.xlane.f32.xlu0 %v746
        %v748 = vpop.xlane.xlu0 %747
        %v749 = vsub.f32 %v745, %v748
        %v750 = vmul.f32 %v749, 1.442695
        %v751 = vpow.pop %v750
        %v752 = vsel %vm496, %v751, 0.0
        %753 = vadd.xlane.f32.xlu0 %v752
        %v754 = vpop.xlane.xlu0 %753
        %v755 = vrcp.pop %v754
        %v756 = vmul.f32 %v754, %v755
        %v757 = vsub.f32 1.0, %v756
        %v758 = vmul.f32 %v755, %v757
        %v759 = vadd.f32 %v755, %v758
        %vm760 = vweird.f32 %v754
        %vm761 = vweird.f32 %v755
        %vm762 = vmor %vm760, %vm761
        %v763 = vsel %vm762, %v755, %v759
        %v764 = vand.u32 2147483647, %v754
        %vm765 = vcmp.eq.f32.partialorder %v764, 8.507059e+37
        %v766 = vand.u32 %v754, 2147483648
        %v767 = vor.u32 1.1754944e-38, %v766
        %v768 = vsel %vm765, %v767, %v763
        %v769 = vmul.f32 %v751, %v768
        %v770 = vpack.c.bf16 %v769, %v769
        %771 = vrot.lane.b32.xlu0 %v492, 40
        %v772 = vpop.permute.xlu0 %771
        %v774 = vsel %vm496, %v770, 0
        %v777 = vsel %vm547, %v772, 0
        %779 = vmatpush.bf16.msra.mxu0 0
        %780 = vmatpush.bf16.msra.mxu0 0
        %781 = vmatpush.bf16.msra.mxu0 0
        %782 = vmatpush.bf16.msra.mxu0 0
        %783 = vmatpush.bf16.msra.mxu0 0
        %784 = vmatpush.bf16.msra.mxu0 0
        %785 = vmatpush.bf16.msra.mxu0 0
        %786 = vmatpush.bf16.msra.mxu0 %v777
        %787 = vmatmul.bf16.gmra.mxu0 %v774
        %v788 = vpop.f32.mrf.mxu0
        %v789 = vadd.f32 0.0, %v788
        %v790 = vpop.f32.mrf.mxu0
        %791 = vdwg.mxu0
        %v792 = vpack.c.bf16 %v789, %v789
        %794 = vrot.lane.b32.xlu0 %v792, 24
        %v795 = vpop.permute.xlu0 %794
        %vm797 = vcmask 257216
        %798 = vst.msk [vmem:[#allocation2] sm:$0xf] %vm797, %v795
        %v799 = vld [vmem:[#allocation2] sm:$0xf]
        %v800 = vld [vmem:[%s4] sm:$0xf]
        %v801 = vld [vmem:[%s4 + $0x4] sm:$0xf]
        %v802 = vld [vmem:[%s4 + $0x8] sm:$0xf]
        %v803 = vld [vmem:[%s4 + $0xc] sm:$0xf]
        %v808 = vunpack.c.l.b16 %v800
        %v809 = vunpack.c.l.b16 %v801
        %v810 = vunpack.c.l.b16 %v802
        %v811 = vunpack.c.l.b16 %v803
        %v812 = vpack.c.b16 %v809, %v808
        %v813 = vpack.c.b16 %v811, %v810
        %v817 = vsel %vm414, %v799, 0
        %819 = vmatpush.bf16.msra.mxu0 0
        %820 = vmatpush.bf16.msra.mxu0 0
        %821 = vmatpush.bf16.msra.mxu0 0
        %822 = vmatpush.bf16.msra.mxu0 0
        %823 = vmatpush.bf16.msra.mxu0 0
        %824 = vmatpush.bf16.msra.mxu0 0
        %825 = vmatpush.bf16.msra.mxu0 %v813
        %826 = vmatpush.bf16.msra.mxu0 %v812
        %827 = vmatmul.bf16.gmra.mxu0 %v817
        %v828 = vpop.f32.mrf.mxu0
        %v829 = vadd.f32 0.0, %v828
        %v830 = vpop.f32.mrf.mxu0
        %831 = vdwg.mxu0
        %v832 = vadd.f32 %v411, %v829
        %v833 = vld [vmem:[%s5] sm:$0x1]
        %v835 = vperm.slane %v833, 0
        %v837 = vadd.f32 %v832, %v835
        %v838 = vld [vmem:[%s6] sm:$0x1]
        %v839 = vld [vmem:[%s7] sm:$0x1]
        %v840 = vsel %vm414, %v837, 0.0
        %841 = vadd.xlane.f32.xlu0 %v840
        %v842 = vpop.xlane.xlu0 %841
        %v843 = vmul.f32 %v842, %v424
        %v844 = vsub.f32 %v837, %v843
        %v845 = vmul.f32 %v844, %v844
        %v846 = vsel %vm414, %v845, 0.0
        %847 = vadd.xlane.f32.xlu0 %v846
        %v848 = vpop.xlane.xlu0 %847
        %v849 = vmul.f32 %v848, %v424
        %v850 = vadd.f32 %v849, 1e-05
        %v851 = vrsqrt.pop %v850
        %v852 = vmul.f32 %v851, %v850
        %v853 = vmul.f32 %v852, %v851
        %v854 = vmul.f32 0.5, %v853
        %v855 = vsub.f32 1.5, %v854
        %v856 = vmul.f32 %v851, %v855
        %vm857 = vweird.f32 %v850
        %vm858 = vweird.f32 %v851
        %vm859 = vmor %vm857, %vm858
        %v860 = vsel %vm859, %v851, %v856
        %v861 = vmul.f32 %v844, %v860
        %v863 = vperm.slane %v838, 0
        %v865 = vmul.f32 %v861, %v863
        %v867 = vperm.slane %v839, 0
        %v869 = vadd.f32 %v865, %v867
        %v870 = vpack.c.bf16 %v869, %v869
        %v871 = vld [vmem:[%s8] sm:$0xf]
        %v872 = vld [vmem:[%s8 + $0x4] sm:$0xf]
        %v873 = vld [vmem:[%s8 + $0x8] sm:$0xf]
        %v874 = vld [vmem:[%s8 + $0xc] sm:$0xf]
        %v875 = vld [vmem:[%s9] sm:$0x1]
        %v877 = vperm.slane %v875, 0
        %v883 = vunpack.c.l.b16 %v871
        %v884 = vunpack.c.l.b16 %v872
        %v885 = vunpack.c.l.b16 %v873
        %v886 = vunpack.c.l.b16 %v874
        %v887 = vpack.c.b16 %v884, %v883
        %v888 = vpack.c.b16 %v886, %v885
        %v892 = vsel %vm414, %v870, 0
        %894 = vmatpush.bf16.msra.mxu0 0
        %895 = vmatpush.bf16.msra.mxu0 0
        %896 = vmatpush.bf16.msra.mxu0 0
        %897 = vmatpush.bf16.msra.mxu0 0
        %898 = vmatpush.bf16.msra.mxu0 0
        %899 = vmatpush.bf16.msra.mxu0 0
        %900 = vmatpush.bf16.msra.mxu0 %v888
        %901 = vmatpush.bf16.msra.mxu0 %v887
        %902 = vmatmul.bf16.gmra.mxu0 %v892
        %v903 = vpop.f32.mrf.mxu0
        %v904 = vadd.f32 %v877, %v903
        %v905 = vpop.f32.mrf.mxu0
        %906 = vdwg.mxu0
        %v907 = vmul.f32 %v904, 0.5
        %v908 = vmul.f32 %v904, %v904
        %v909 = vmul.f32 %v904, %v908
        %v910 = vmul.f32 %v909, 0.044715
        %v911 = vadd.f32 %v904, %v910
        %v912 = vmul.f32 %v911, 0.7978846
        %v913 = vtanh.pop %v912
        %v914 = vadd.f32 %v913, 1.0
        %v915 = vmul.f32 %v907, %v914
        %v916 = vpack.c.bf16 %v915, %v915
        %v917 = vld [vmem:[%s10] sm:$0xf]
        %v918 = vld [vmem:[%s10 + $0x4] sm:$0xf]
        %v919 = vld [vmem:[%s10 + $0x8] sm:$0xf]
        %v920 = vld [vmem:[%s10 + $0xc] sm:$0xf]
        %v921 = vld [vmem:[%s10 + $0x10] sm:$0xf]
        %v922 = vld [vmem:[%s10 + $0x14] sm:$0xf]
        %v923 = vld [vmem:[%s10 + $0x18] sm:$0xf]
        %v924 = vld [vmem:[%s10 + $0x1c] sm:$0xf]
        %v925 = vld [vmem:[%s10 + $0x20] sm:$0xf]
        %v926 = vld [vmem:[%s10 + $0x24] sm:$0xf]
        %v927 = vld [vmem:[%s10 + $0x28] sm:$0xf]
        %v928 = vld [vmem:[%s10 + $0x2c] sm:$0xf]
        %v929 = vld [vmem:[%s10 + $0x30] sm:$0xf]
        %v930 = vld [vmem:[%s10 + $0x34] sm:$0xf]
        %v931 = vld [vmem:[%s10 + $0x38] sm:$0xf]
        %v932 = vld [vmem:[%s10 + $0x3c] sm:$0xf]
        %v933 = vld [vmem:[%s11] sm:$0x1]
        %v935 = vperm.slane %v933, 0
        %v953 = vunpack.c.l.b16 %v917
        %v954 = vunpack.c.l.b16 %v918
        %v955 = vunpack.c.l.b16 %v919
        %v956 = vunpack.c.l.b16 %v920
        %v957 = vunpack.c.l.b16 %v921
        %v958 = vunpack.c.l.b16 %v922
        %v959 = vunpack.c.l.b16 %v923
        %v960 = vunpack.c.l.b16 %v924
        %v961 = vunpack.c.l.b16 %v925
        %v962 = vunpack.c.l.b16 %v926
        %v963 = vunpack.c.l.b16 %v927
        %v964 = vunpack.c.l.b16 %v928
        %v965 = vunpack.c.l.b16 %v929
        %v966 = vunpack.c.l.b16 %v930
        %v967 = vunpack.c.l.b16 %v931
        %v968 = vunpack.c.l.b16 %v932
        %v969 = vpack.c.b16 %v954, %v953
        %v970 = vpack.c.b16 %v956, %v955
        %v971 = vpack.c.b16 %v958, %v957
        %v972 = vpack.c.b16 %v960, %v959
        %v973 = vpack.c.b16 %v962, %v961
        %v974 = vpack.c.b16 %v964, %v963
        %v975 = vpack.c.b16 %v966, %v965
        %v976 = vpack.c.b16 %v968, %v967
        %985 = vmatpush.bf16.msra.mxu0 %v976
        %986 = vmatpush.bf16.msra.mxu0 %v975
        %987 = vmatpush.bf16.msra.mxu0 %v974
        %988 = vmatpush.bf16.msra.mxu0 %v973
        %989 = vmatpush.bf16.msra.mxu0 %v972
        %990 = vmatpush.bf16.msra.mxu0 %v971
        %991 = vmatpush.bf16.msra.mxu0 %v970
        %992 = vmatpush.bf16.msra.mxu0 %v969
        %993 = vmatmul.bf16.gmra.mxu0 %v916
        %v994 = vpop.f32.mrf.mxu0
        %v995 = vadd.f32 %v935, %v994
        %v996 = vpop.f32.mrf.mxu0
        %997 = vdwg.mxu0
        %v998 = vadd.f32 %v837, %v995
        %v999 = vpack.c.bf16 %v998, %v998
        %vm1000 = vcmask 257024
        %1001 = vst.msk [vmem:[%s404] sm:$0xf] %vm1000, %v999
        %s1002 = sand.u32 %s291, 1
        %s1003 = scalar_lea.sflag [#allocation4], %s1002
        %s1004 = sand.u32 %s291, 1
        %s1005 = smul.addr %s1004, 4
        %s1006 = scalar_lea.vmem [#allocation3], %s1005
        // Predicated region
        $region69: #{tpu_custom_call.1} parent=67 // pred_check
          %p1007 = pneg %p301
        $region70: #{tpu_custom_call.1} parent=67 // pred_check_branch
          %1009 = sbr.rel (%p1007) target = $region72
        $region71: #{tpu_custom_call.1} parent=67 // pred_region
          %1011 = vsyncadd %s1003, 0
          %s1012 = smul.addr %s26, 4
          %s1013 = scalar_lea.hbm %s12, %s1012
          %s1015 = sshll.u32 %s1006, 4
          %s1016 = int_to_ptr.vmem [resolvable:$true] %s1015
          %s1017 = sshll.u32 %s1013, 4
          %s1018 = int_to_ptr.hbm [resolvable:$true] %s1017
          %1020 = dma.vmem_to_hbm [thread:$0]  %s1016, 64, %s1018, %s1003
        $region72: #{tpu_custom_call.1} parent=67 // pred_fallthru
          _
      $region68: #{tpu_custom_call.1} parent=5 // pred_fallthru
        _
      %p1021 = scmp.le.s32.totalorder 2, %s21
      // Predicated region
      $region73: #{tpu_custom_call.1} parent=5 // pred_check
        %p1022 = pneg %p1021
      $region74: #{tpu_custom_call.1} parent=5 // pred_check_branch
        %1024 = sbr.rel (%p1022) target = $region76
      $region75: #{tpu_custom_call.1} parent=5 // pred_region
        %s1025 = ssub.s32 %s21, 2
        // Predicated region
        $region77: #{tpu_custom_call.1} parent=75 // pred_check
          %p1026 = pneg %p307
        $region78: #{tpu_custom_call.1} parent=75 // pred_check_branch
          %1028 = sbr.rel (%p1026) target = $region80
        $region79: #{tpu_custom_call.1} parent=75 // pred_region
          %s1029 = sand.u32 %s292, 1
          %s1030 = scalar_lea.sflag [#allocation4], %s1029
          %s1031 = sand.u32 %s292, 1
          %s1032 = smul.addr %s1031, 4
          %s1033 = scalar_lea.vmem [#allocation3], %s1032
          %1035 = dma.done %s1030, 64
        $region80: #{tpu_custom_call.1} parent=75 // pred_fallthru
          _
      $region76: #{tpu_custom_call.1} parent=5 // pred_fallthru
        _
    $region6: #{tpu_custom_call.1} parent=1 // loop_footer
      %s25 = sadd.s32 1, %s21
    $region7: #{tpu_custom_call.1} parent=1 // loop_footer_branch
      %20 = sbr.rel target = $region3
    $region8: #{tpu_custom_call.1} parent=1 // loop_exit
      _
    %1036 = vsyncpa [#allocation4], 1
    %s1037 = scalar_lea.sflag [#allocation4], 1
    %1038 = vsyncpa %s1037, 1

</llo_original>
